<compile_context>
chip_gen: v7x
topology: tpu7x:2x2x1
jax: 0.10.0
libtpu: 0.0.40
codegen_flags: <defaults>
</compile_context>

<pallas_src>
from functools import lru_cache

import numpy as np
import jax
import jax.numpy as jnp
from jax.experimental import pallas as pl
from jax.experimental.pallas import tpu as pltpu

# Module-level constants the PyTorch file relies on (globals there).
INFERENCE_OUTPUT_SIZE = 16
TARGET_RESIZE_RATIO = 2
THRESHOLD = 0.5


def _bilinear_matrix_np(in_size: int, out_size: int) -> np.ndarray:
    """Row-interpolation matrix matching torch F.interpolate(bilinear, align_corners=False)."""
    scale = in_size / out_size
    out_idx = np.arange(out_size, dtype=np.float64)
    src = np.maximum((out_idx + 0.5) * scale - 0.5, 0.0)
    i0 = np.minimum(np.floor(src).astype(np.int64), in_size - 1)
    i1 = np.minimum(i0 + 1, in_size - 1)
    w1 = (src - i0).astype(np.float32)
    w0 = 1.0 - w1
    mat = np.zeros((out_size, in_size), dtype=np.float32)
    mat[np.arange(out_size), i0] += w0
    mat[np.arange(out_size), i1] += w1
    return mat  # (out_size, in_size)


@lru_cache(maxsize=None)
def _interp_matrix_bf16(h: int, w: int, oh: int, ow: int):
    """Fused (kron) bilinear matrix KT: up_flat = logits_flat @ KT.

    Entries are products of {0, 0.25, 0.75, 1} for a 2x upsample, so the bf16
    cast is bit-exact.  Built once with numpy and cached per spatial config.
    """
    R = _bilinear_matrix_np(h, oh)        # (OH, H)  row pass
    Cm = _bilinear_matrix_np(w, ow).T     # (W, OW)  column pass
    kt = np.kron(R.T, Cm).astype(np.float32)   # (H*W, OH*OW)
    return jnp.asarray(kt, dtype=jnp.bfloat16)


def ensemble_kernel(x_ref, w_ref, b_ref, kt_ref, o_ref):
    """Single invocation: whole ensemble, all batches.

    x_ref  : (B, C, HW)    flattened input images (lane-dense HW)
    w_ref  : (M, C)        all 1x1-conv head weights
    b_ref  : (M, 1)        per-head biases
    kt_ref : (HW, OH*OW)   bf16 Kronecker bilinear-interpolation matrix
    o_ref  : (B, OH*OW)    thresholded ensemble output (lane-dense)
    """
    batch = x_ref.shape[0]
    n_models = w_ref.shape[0]

    w = w_ref[...]                                   # (M, C)
    bias = b_ref[...]                                # (M, 1)
    kt = kt_ref[...].astype(jnp.float32)             # exact bf16 -> f32 widen

    rows = []
    for b in range(batch):                           # B=2, static unroll
        # 1x1 conv for all M heads: one tiny MXU matmul, bias broadcast-added
        # (bias commutes with the upsample: every interpolation row sums to 1).
        logits = jnp.dot(w, x_ref[b],
                         preferred_element_type=jnp.float32) + bias   # (M, HW)
        # Fused separable bilinear upsample: one lane-dense MXU matmul.
        up = jnp.dot(logits, kt,
                     preferred_element_type=jnp.float32)              # (M, OHW)
        probs = jax.nn.sigmoid(up)                                    # EUP path
        rows.append(jnp.sum(probs, axis=0, keepdims=True))            # (1, OHW)

    votes = jnp.concatenate(rows, axis=0)                             # (B, OHW)
    # mean(probs) > THRESHOLD  ==  sum(probs) > M * THRESHOLD
    o_ref[...] = (votes > (n_models * THRESHOLD)).astype(o_ref.dtype)


def ensemble_forward(x, conv_w, conv_b):
    """x: (B, C, H, W) f32 NCHW; conv_w: (M, C, 1, 1); conv_b: (M, 1, 1)."""
    B, C, H, W = x.shape
    M = conv_w.shape[0]
    OH = OW = INFERENCE_OUTPUT_SIZE * TARGET_RESIZE_RATIO
    HW, OHW = H * W, OH * OW

    kt = _interp_matrix_bf16(H, W, OH, OW)           # (HW, OHW) bf16, cached

    # Wrapper-side layout plumbing only (no extra copies of x beyond reshape).
    x_flat = x.reshape(B, C, HW)                     # (B, C, HW)
    w2d = conv_w.reshape(M, C)                       # (M, C)
    b2d = conv_b.reshape(M, 1)                       # (M, 1)

    grid_spec = pltpu.PrefetchScalarGridSpec(
        num_scalar_prefetch=0,
        grid=(1,),                                   # single step: no pipeline waste
        in_specs=[
            pl.BlockSpec((B, C, HW), lambda i: (0, 0, 0)),   # x (all batches)
            pl.BlockSpec((M, C), lambda i: (0, 0)),          # head weights
            pl.BlockSpec((M, 1), lambda i: (0, 0)),          # head biases
            pl.BlockSpec((HW, OHW), lambda i: (0, 0)),       # bf16 KT
        ],
        out_specs=pl.BlockSpec((B, OHW), lambda i: (0, 0)),
    )

    out_flat = pl.pallas_call(
        ensemble_kernel,
        out_shape=jax.ShapeDtypeStruct((B, OHW), jnp.float32),
        grid_spec=grid_spec,
        compiler_params=pltpu.CompilerParams(
            dimension_semantics=("arbitrary",)),
    )(x_flat, w2d, b2d, kt)

    return out_flat.reshape(B, OH, OW)


def ensemble_reference_mean(x, conv_w, conv_b):
    """Pure-JAX f32 reference: pre-threshold ensemble mean (for verification)."""
    _, _, H, W = x.shape
    OH = OW = INFERENCE_OUTPUT_SIZE * TARGET_RESIZE_RATIO
    R = jnp.asarray(_bilinear_matrix_np(H, OH))      # (OH, H)
    Cm = jnp.asarray(_bilinear_matrix_np(W, OW).T)   # (W, OW)
    logits = jnp.einsum('bchw,mc->mbhw', x, conv_w[:, :, 0, 0]) \
        + conv_b[:, None, :, :]                                   # (M, B, H, W)
    up = jnp.einsum('oh,mbhw,wp->mbop', R, logits, Cm)            # (M, B, OH, OW)
    return jax.nn.sigmoid(up).mean(axis=0)                        # (B, OH, OW)


if __name__ == "__main__":
    key = jax.random.PRNGKey(0)
    k_x, k_w, k_b = jax.random.split(key, 3)

    B, C, H, W = 2, 4, 16, 16      # NCHW, like the PyTorch module's input
    M = 3                          # number of ensemble members

    x = jax.random.normal(k_x, (B, C, H, W), dtype=jnp.float32)
    conv_w = jax.random.normal(k_w, (M, C, 1, 1), dtype=jnp.float32) * 0.5
    conv_b = jax.random.normal(k_b, (M, 1, 1), dtype=jnp.float32) * 0.1

    out = jax.block_until_ready(ensemble_forward(x, conv_w, conv_b))
    ref_mean = jax.block_until_ready(ensemble_reference_mean(x, conv_w, conv_b))
    ref = (ref_mean > THRESHOLD).astype(jnp.float32)

    OUT = INFERENCE_OUTPUT_SIZE * TARGET_RESIZE_RATIO
    assert out.shape == (B, OUT, OUT)
    assert out.dtype == jnp.float32

    # Robust comparison of binary outputs: the kernel (fused kron matmul) and
    # the reference (separable einsum) use different summation orders, so a
    # pixel may only legitimately differ if its mean sits numerically on the
    # 0.5 decision boundary.
    mismatch = out != ref
    on_boundary = jnp.abs(ref_mean - THRESHOLD) < 1e-5
    assert bool(jnp.all(jnp.logical_or(~mismatch, on_boundary))), \
        "Pallas kernel mismatch vs JAX reference away from the decision boundary"

    print("KERNEL_OK")
</pallas_src>

<mosaic_0001>
module attributes {stable_mosaic.version = 11 : i64} {
  func.func @ensemble_kernel(%arg0: i32, %arg1: memref<2x4x256xf32, #tpu.memory_space<vmem>>, %arg2: memref<3x4xf32, #tpu.memory_space<vmem>>, %arg3: memref<3x1xf32, #tpu.memory_space<vmem>>, %arg4: memref<256x1024xbf16, #tpu.memory_space<vmem>>, %arg5: memref<2x1024xf32, #tpu.memory_space<vmem>>) attributes {dimension_semantics = [#tpu.dimension_semantics<arbitrary>], iteration_bounds = array<i64: 1>, scalar_prefetch = 0 : i64, scratch_operands = 0 : i64, tpu.core_type = #tpu.core_type<tc>, window_params = [{pipeline_mode = #tpu.pipeline_mode<synchronous>, transform_indices = @transform_0, window_bounds = array<i64: 2, 4, 256>}, {pipeline_mode = #tpu.pipeline_mode<synchronous>, transform_indices = @transform_1, window_bounds = array<i64: 3, 4>}, {pipeline_mode = #tpu.pipeline_mode<synchronous>, transform_indices = @transform_2, window_bounds = array<i64: 3, 1>}, {pipeline_mode = #tpu.pipeline_mode<synchronous>, transform_indices = @transform_3, window_bounds = array<i64: 256, 1024>}, {pipeline_mode = #tpu.pipeline_mode<synchronous>, transform_indices = @transform_4, window_bounds = array<i64: 2, 1024>}]} {
    %c0 = arith.constant 0 : index
    %c0_0 = arith.constant 0 : index
    %0 = vector.load %arg2[%c0, %c0_0] : memref<3x4xf32, #tpu.memory_space<vmem>>, vector<3x4xf32>
    %c0_1 = arith.constant 0 : index
    %c0_2 = arith.constant 0 : index
    %1 = vector.load %arg3[%c0_1, %c0_2] : memref<3x1xf32, #tpu.memory_space<vmem>>, vector<3x1xf32>
    %c0_3 = arith.constant 0 : index
    %c0_4 = arith.constant 0 : index
    %2 = vector.load %arg4[%c0_3, %c0_4] : memref<256x1024xbf16, #tpu.memory_space<vmem>>, vector<256x1024xbf16>
    %3 = arith.extf %2 : vector<256x1024xbf16> to vector<256x1024xf32>
    %c0_5 = arith.constant 0 : index
    %c0_6 = arith.constant 0 : index
    %c0_7 = arith.constant 0 : index
    %4 = vector.load %arg1[%c0_5, %c0_6, %c0_7] : memref<2x4x256xf32, #tpu.memory_space<vmem>>, vector<1x4x256xf32>
    %5 = vector.shape_cast %4 : vector<1x4x256xf32> to vector<4x256xf32>
    %cst = arith.constant dense<0.000000e+00> : vector<3x256xf32>
    %6 = tpu.matmul %0, %5, %cst {dimension_numbers = #tpu.dot_dimension_numbers<[1], [0], [0], [1], [0, 0, 1, 1], [], []>} : vector<3x4xf32>, vector<4x256xf32>, vector<3x256xf32> -> vector<3x256xf32>
    %7 = vector.broadcast %1 : vector<3x1xf32> to vector<3x256xf32>
    %8 = arith.addf %6, %7 : vector<3x256xf32>
    %cst_8 = arith.constant dense<0.000000e+00> : vector<3x1024xf32>
    %9 = tpu.matmul %8, %3, %cst_8 {dimension_numbers = #tpu.dot_dimension_numbers<[1], [0], [0], [1], [0, 0, 1, 1], [], []>} : vector<3x256xf32>, vector<256x1024xf32>, vector<3x1024xf32> -> vector<3x1024xf32>
    %10 = arith.negf %9 : vector<3x1024xf32>
    %11 = math.exp %10 : vector<3x1024xf32>
    %cst_9 = arith.constant 1.000000e+00 : f32
    %12 = vector.broadcast %cst_9 : f32 to vector<3x1024xf32>
    %13 = arith.addf %12, %11 : vector<3x1024xf32>
    %14 = arith.divf %12, %13 : vector<3x1024xf32>
    %cst_10 = arith.constant dense<0.000000e+00> : vector<1024xf32>
    %15 = vector.multi_reduction <add>, %14, %cst_10 [0] : vector<3x1024xf32> to vector<1024xf32>
    %16 = vector.shape_cast %15 : vector<1024xf32> to vector<1x1024xf32>
    %c1 = arith.constant 1 : index
    %c0_11 = arith.constant 0 : index
    %c0_12 = arith.constant 0 : index
    %17 = vector.load %arg1[%c1, %c0_11, %c0_12] : memref<2x4x256xf32, #tpu.memory_space<vmem>>, vector<1x4x256xf32>
    %18 = vector.shape_cast %17 : vector<1x4x256xf32> to vector<4x256xf32>
    %cst_13 = arith.constant dense<0.000000e+00> : vector<3x256xf32>
    %19 = tpu.matmul %0, %18, %cst_13 {dimension_numbers = #tpu.dot_dimension_numbers<[1], [0], [0], [1], [0, 0, 1, 1], [], []>} : vector<3x4xf32>, vector<4x256xf32>, vector<3x256xf32> -> vector<3x256xf32>
    %20 = vector.broadcast %1 : vector<3x1xf32> to vector<3x256xf32>
    %21 = arith.addf %19, %20 : vector<3x256xf32>
    %cst_14 = arith.constant dense<0.000000e+00> : vector<3x1024xf32>
    %22 = tpu.matmul %21, %3, %cst_14 {dimension_numbers = #tpu.dot_dimension_numbers<[1], [0], [0], [1], [0, 0, 1, 1], [], []>} : vector<3x256xf32>, vector<256x1024xf32>, vector<3x1024xf32> -> vector<3x1024xf32>
    %23 = arith.negf %22 : vector<3x1024xf32>
    %24 = math.exp %23 : vector<3x1024xf32>
    %cst_15 = arith.constant 1.000000e+00 : f32
    %25 = vector.broadcast %cst_15 : f32 to vector<3x1024xf32>
    %26 = arith.addf %25, %24 : vector<3x1024xf32>
    %27 = arith.divf %25, %26 : vector<3x1024xf32>
    %cst_16 = arith.constant dense<0.000000e+00> : vector<1024xf32>
    %28 = vector.multi_reduction <add>, %27, %cst_16 [0] : vector<3x1024xf32> to vector<1024xf32>
    %29 = vector.shape_cast %28 : vector<1024xf32> to vector<1x1024xf32>
    %30 = tpu.concatenate %16, %29 in 0 : vector<1x1024xf32>, vector<1x1024xf32> -> vector<2x1024xf32>
    %cst_17 = arith.constant 1.500000e+00 : f32
    %31 = vector.broadcast %cst_17 : f32 to vector<2x1024xf32>
    %32 = arith.cmpf ogt, %30, %31 : vector<2x1024xf32>
    %33 = arith.extui %32 : vector<2x1024xi1> to vector<2x1024xi32>
    %34 = arith.sitofp %33 : vector<2x1024xi32> to vector<2x1024xf32>
    %c0_18 = arith.constant 0 : index
    %c0_19 = arith.constant 0 : index
    %35 = vector.load %arg5[%c0_18, %c0_19] : memref<2x1024xf32, #tpu.memory_space<vmem>>, vector<2x1024xf32>
    tpu.vector_store %arg5[%c0_18, %c0_19], %34 {strides = array<i32>} : memref<2x1024xf32, #tpu.memory_space<vmem>>, vector<2x1024xf32>,
    return
  }
  func.func @transform_0(%arg0: i32) -> (i32, i32, i32) {
    %c0_i32 = arith.constant 0 : i32
    %c0_i32_0 = arith.constant 0 : i32
    %c0_i32_1 = arith.constant 0 : i32
    %c0_i32_2 = arith.constant 0 : i32
    return %c0_i32, %c0_i32_0, %c0_i32_1 : i32, i32, i32
  }
  func.func @transform_1(%arg0: i32) -> (i32, i32) {
    %c0_i32 = arith.constant 0 : i32
    %c0_i32_0 = arith.constant 0 : i32
    %c0_i32_1 = arith.constant 0 : i32
    return %c0_i32, %c0_i32_0 : i32, i32
  }
  func.func @transform_2(%arg0: i32) -> (i32, i32) {
    %c0_i32 = arith.constant 0 : i32
    %c0_i32_0 = arith.constant 0 : i32
    %c0_i32_1 = arith.constant 0 : i32
    return %c0_i32, %c0_i32_0 : i32, i32
  }
  func.func @transform_3(%arg0: i32) -> (i32, i32) {
    %c0_i32 = arith.constant 0 : i32
    %c0_i32_0 = arith.constant 0 : i32
    %c0_i32_1 = arith.constant 0 : i32
    return %c0_i32, %c0_i32_0 : i32, i32
  }
  func.func @transform_4(%arg0: i32) -> (i32, i32) {
    %c0_i32 = arith.constant 0 : i32
    %c0_i32_0 = arith.constant 0 : i32
    %c0_i32_1 = arith.constant 0 : i32
    return %c0_i32, %c0_i32_0 : i32, i32
  }
}

</mosaic_0001>

<llo_original>
// kernel: tpu_custom_call.1
$region0: #{tpu_custom_call.1}
  #allocation0 [shape = 'u32[]', space=smem, size = 0x4, offset = 0x4, fixed_abs, tag = 'smem constant byte address 0x4 - core index']
  #allocation1 [shape = 'u32[144,128]{1,0:T(1,128)}', space=vmem, size = 0x12000, scoped, tag = 'internal scratch']
  %s0 = inlined_call_operand.hbm [shape: f32[2,4,256], index: 0, kind: input, shape index: {}]
  %s1 = inlined_call_operand.vmem [shape: f32[3,4], index: 1, kind: input, shape index: {}]
  %s2 = inlined_call_operand.vmem [shape: f32[3,1], index: 2, kind: input, shape index: {}]
  %s3 = inlined_call_operand.hbm [shape: bf16[256,1024], index: 3, kind: input, shape index: {}]
  %s4 = inlined_call_operand.hbm [shape: f32[2,1024], index: 4, kind: output, shape index: {}]
  %s5 = sld [smem:[#allocation0]]
  $region34: #{tpu_custom_call.1} parent=0
    _
  %s7 = ssub.s32 1, %s5
  %s8 = scalar_select 0, %s7, %s5
  $region1: #{tpu_custom_call.1} parent=0
    #allocation2 [shape = 'u8[8192]{0}', space=vmem, size = 0x2000, scoped, tag = 'input window, operand 0, single buffered']
    #allocation3 [shape = 's32[1]{0}', space=sflag, size = 0x4, scoped, tag = 'scoped memory for tpu_custom_call.1']
    #allocation4 [shape = 's32[1]{0}', space=sflag, size = 0x4, scoped, tag = 'scoped memory for tpu_custom_call.1']
    #allocation5 [shape = 'u8[524288]{0}', space=vmem, size = 0x80000, scoped, tag = 'input window, operand 3, single buffered']
    #allocation6 [shape = 's32[1]{0}', space=sflag, size = 0x4, scoped, tag = 'scoped memory for tpu_custom_call.1']
    #allocation7 [shape = 'u8[8192]{0}', space=vmem, size = 0x2000, scoped, tag = 'output window, operand 0, single buffered']
    %9 = vsyncpa [#allocation3], 0
    %10 = vsyncpa [#allocation6], 0
    %11 = vsyncpa [#allocation4], 0
    // Predicated region
    $region2: #{tpu_custom_call.1} parent=1 // pred_check
      _
    $region3: #{tpu_custom_call.1} parent=1 // pred_check_branch
      %13 = sbr.rel (0) target = $region5
    $region4: #{tpu_custom_call.1} parent=1 // pred_region
      %s15 = ssub.s32 256, 256
      %16 = vsyncadd [#allocation3], %s15
      %s17 = sshll.u32 [#allocation2], 4
      %s18 = int_to_ptr.vmem [resolvable:$true] %s17
      %23 = dma.hbm_to_vmem [thread:$0]  %s0, 256, %s18, [#allocation3], 128, 128, 8
    $region5: #{tpu_custom_call.1} parent=1 // pred_fallthru
      _
    // Predicated region
    $region6: #{tpu_custom_call.1} parent=1 // pred_check
      _
    $region7: #{tpu_custom_call.1} parent=1 // pred_check_branch
      %25 = sbr.rel (0) target = $region9
    $region8: #{tpu_custom_call.1} parent=1 // pred_region
      _
    $region9: #{tpu_custom_call.1} parent=1 // pred_fallthru
      _
    // Predicated region
    $region10: #{tpu_custom_call.1} parent=1 // pred_check
      _
    $region11: #{tpu_custom_call.1} parent=1 // pred_check_branch
      %27 = sbr.rel (0) target = $region13
    $region12: #{tpu_custom_call.1} parent=1 // pred_region
      _
    $region13: #{tpu_custom_call.1} parent=1 // pred_fallthru
      _
    // Predicated region
    $region14: #{tpu_custom_call.1} parent=1 // pred_check
      _
    $region15: #{tpu_custom_call.1} parent=1 // pred_check_branch
      %29 = sbr.rel (0) target = $region17
    $region16: #{tpu_custom_call.1} parent=1 // pred_region
      %s31 = ssub.s32 16384, 16384
      %32 = vsyncadd [#allocation6], %s31
      %s33 = sshll.u32 [#allocation5], 4
      %s34 = int_to_ptr.vmem [resolvable:$true] %s33
      %39 = dma.hbm_to_vmem [thread:$0]  %s3, 16384, %s34, [#allocation6], 512, 512, 32
    $region17: #{tpu_custom_call.1} parent=1 // pred_fallthru
      _
    // Predicated region
    $region18: #{tpu_custom_call.1} parent=1 // pred_check
      _
    $region19: #{tpu_custom_call.1} parent=1 // pred_check_branch
      %41 = sbr.rel (0) target = $region21
    $region20: #{tpu_custom_call.1} parent=1 // pred_region
      %42 = dma.done [#allocation3], 256
    $region21: #{tpu_custom_call.1} parent=1 // pred_fallthru
      _
    // Predicated region
    $region22: #{tpu_custom_call.1} parent=1 // pred_check
      _
    $region23: #{tpu_custom_call.1} parent=1 // pred_check_branch
      %44 = sbr.rel (0) target = $region25
    $region24: #{tpu_custom_call.1} parent=1 // pred_region
      %45 = dma.done [#allocation6], 16384
    $region25: #{tpu_custom_call.1} parent=1 // pred_fallthru
      _
    %v46 = vld [vmem:[%s1] sm:$0x7]
    %v47 = vld [vmem:[%s2] sm:$0x7]
    %v48 = vld [vmem:[#allocation5] sm:$0xff]
    %v49 = vld [vmem:[#allocation5 + $0x8] sm:$0xff]
    %v50 = vld [vmem:[#allocation5 + $0x10] sm:$0xff]
    %v51 = vld [vmem:[#allocation5 + $0x18] sm:$0xff]
    %v52 = vld [vmem:[#allocation5 + $0x20] sm:$0xff]
    %v53 = vld [vmem:[#allocation5 + $0x28] sm:$0xff]
    %v54 = vld [vmem:[#allocation5 + $0x30] sm:$0xff]
    %v55 = vld [vmem:[#allocation5 + $0x38] sm:$0xff]
    %v56 = vld [vmem:[#allocation5 + $0x40] sm:$0xff]
    %v57 = vld [vmem:[#allocation5 + $0x48] sm:$0xff]
    %v58 = vld [vmem:[#allocation5 + $0x50] sm:$0xff]
    %v59 = vld [vmem:[#allocation5 + $0x58] sm:$0xff]
    %v60 = vld [vmem:[#allocation5 + $0x60] sm:$0xff]
    %v61 = vld [vmem:[#allocation5 + $0x68] sm:$0xff]
    %v62 = vld [vmem:[#allocation5 + $0x70] sm:$0xff]
    %v63 = vld [vmem:[#allocation5 + $0x78] sm:$0xff]
    %v64 = vld [vmem:[#allocation5 + $0x80] sm:$0xff]
    %v65 = vld [vmem:[#allocation5 + $0x88] sm:$0xff]
    %v66 = vld [vmem:[#allocation5 + $0x90] sm:$0xff]
    %v67 = vld [vmem:[#allocation5 + $0x98] sm:$0xff]
    %v68 = vld [vmem:[#allocation5 + $0xa0] sm:$0xff]
    %v69 = vld [vmem:[#allocation5 + $0xa8] sm:$0xff]
    %v70 = vld [vmem:[#allocation5 + $0xb0] sm:$0xff]
    %v71 = vld [vmem:[#allocation5 + $0xb8] sm:$0xff]
    %v72 = vld [vmem:[#allocation5 + $0xc0] sm:$0xff]
    %v73 = vld [vmem:[#allocation5 + $0xc8] sm:$0xff]
    %v74 = vld [vmem:[#allocation5 + $0xd0] sm:$0xff]
    %v75 = vld [vmem:[#allocation5 + $0xd8] sm:$0xff]
    %v76 = vld [vmem:[#allocation5 + $0xe0] sm:$0xff]
    %v77 = vld [vmem:[#allocation5 + $0xe8] sm:$0xff]
    %v78 = vld [vmem:[#allocation5 + $0xf0] sm:$0xff]
    %v79 = vld [vmem:[#allocation5 + $0xf8] sm:$0xff]
    %v80 = vld [vmem:[#allocation5 + $0x100] sm:$0xff]
    %v81 = vld [vmem:[#allocation5 + $0x108] sm:$0xff]
    %v82 = vld [vmem:[#allocation5 + $0x110] sm:$0xff]
    %v83 = vld [vmem:[#allocation5 + $0x118] sm:$0xff]
    %v84 = vld [vmem:[#allocation5 + $0x120] sm:$0xff]
    %v85 = vld [vmem:[#allocation5 + $0x128] sm:$0xff]
    %v86 = vld [vmem:[#allocation5 + $0x130] sm:$0xff]
    %v87 = vld [vmem:[#allocation5 + $0x138] sm:$0xff]
    %v88 = vld [vmem:[#allocation5 + $0x140] sm:$0xff]
    %v89 = vld [vmem:[#allocation5 + $0x148] sm:$0xff]
    %v90 = vld [vmem:[#allocation5 + $0x150] sm:$0xff]
    %v91 = vld [vmem:[#allocation5 + $0x158] sm:$0xff]
    %v92 = vld [vmem:[#allocation5 + $0x160] sm:$0xff]
    %v93 = vld [vmem:[#allocation5 + $0x168] sm:$0xff]
    %v94 = vld [vmem:[#allocation5 + $0x170] sm:$0xff]
    %v95 = vld [vmem:[#allocation5 + $0x178] sm:$0xff]
    %v96 = vld [vmem:[#allocation5 + $0x180] sm:$0xff]
    %v97 = vld [vmem:[#allocation5 + $0x188] sm:$0xff]
    %v98 = vld [vmem:[#allocation5 + $0x190] sm:$0xff]
    %v99 = vld [vmem:[#allocation5 + $0x198] sm:$0xff]
    %v100 = vld [vmem:[#allocation5 + $0x1a0] sm:$0xff]
    %v101 = vld [vmem:[#allocation5 + $0x1a8] sm:$0xff]
    %v102 = vld [vmem:[#allocation5 + $0x1b0] sm:$0xff]
    %v103 = vld [vmem:[#allocation5 + $0x1b8] sm:$0xff]
    %v104 = vld [vmem:[#allocation5 + $0x1c0] sm:$0xff]
    %v105 = vld [vmem:[#allocation5 + $0x1c8] sm:$0xff]
    %v106 = vld [vmem:[#allocation5 + $0x1d0] sm:$0xff]
    %v107 = vld [vmem:[#allocation5 + $0x1d8] sm:$0xff]
    %v108 = vld [vmem:[#allocation5 + $0x1e0] sm:$0xff]
    %v109 = vld [vmem:[#allocation5 + $0x1e8] sm:$0xff]
    %v110 = vld [vmem:[#allocation5 + $0x1f0] sm:$0xff]
    %v111 = vld [vmem:[#allocation5 + $0x1f8] sm:$0xff]
    %v112 = vld [vmem:[#allocation5 + $0x200] sm:$0xff]
    %v113 = vld [vmem:[#allocation5 + $0x208] sm:$0xff]
    %v114 = vld [vmem:[#allocation5 + $0x210] sm:$0xff]
    %v115 = vld [vmem:[#allocation5 + $0x218] sm:$0xff]
    %v116 = vld [vmem:[#allocation5 + $0x220] sm:$0xff]
    %v117 = vld [vmem:[#allocation5 + $0x228] sm:$0xff]
    %v118 = vld [vmem:[#allocation5 + $0x230] sm:$0xff]
    %v119 = vld [vmem:[#allocation5 + $0x238] sm:$0xff]
    %v120 = vld [vmem:[#allocation5 + $0x240] sm:$0xff]
    %v121 = vld [vmem:[#allocation5 + $0x248] sm:$0xff]
    %v122 = vld [vmem:[#allocation5 + $0x250] sm:$0xff]
    %v123 = vld [vmem:[#allocation5 + $0x258] sm:$0xff]
    %v124 = vld [vmem:[#allocation5 + $0x260] sm:$0xff]
    %v125 = vld [vmem:[#allocation5 + $0x268] sm:$0xff]
    %v126 = vld [vmem:[#allocation5 + $0x270] sm:$0xff]
    %v127 = vld [vmem:[#allocation5 + $0x278] sm:$0xff]
    %v128 = vld [vmem:[#allocation5 + $0x280] sm:$0xff]
    %v129 = vld [vmem:[#allocation5 + $0x288] sm:$0xff]
    %v130 = vld [vmem:[#allocation5 + $0x290] sm:$0xff]
    %v131 = vld [vmem:[#allocation5 + $0x298] sm:$0xff]
    %v132 = vld [vmem:[#allocation5 + $0x2a0] sm:$0xff]
    %v133 = vld [vmem:[#allocation5 + $0x2a8] sm:$0xff]
    %v134 = vld [vmem:[#allocation5 + $0x2b0] sm:$0xff]
    %v135 = vld [vmem:[#allocation5 + $0x2b8] sm:$0xff]
    %v136 = vld [vmem:[#allocation5 + $0x2c0] sm:$0xff]
    %v137 = vld [vmem:[#allocation5 + $0x2c8] sm:$0xff]
    %v138 = vld [vmem:[#allocation5 + $0x2d0] sm:$0xff]
    %v139 = vld [vmem:[#allocation5 + $0x2d8] sm:$0xff]
    %v140 = vld [vmem:[#allocation5 + $0x2e0] sm:$0xff]
    %v141 = vld [vmem:[#allocation5 + $0x2e8] sm:$0xff]
    %v142 = vld [vmem:[#allocation5 + $0x2f0] sm:$0xff]
    %v143 = vld [vmem:[#allocation5 + $0x2f8] sm:$0xff]
    %v144 = vld [vmem:[#allocation5 + $0x300] sm:$0xff]
    %v145 = vld [vmem:[#allocation5 + $0x308] sm:$0xff]
    %v146 = vld [vmem:[#allocation5 + $0x310] sm:$0xff]
    %v147 = vld [vmem:[#allocation5 + $0x318] sm:$0xff]
    %v148 = vld [vmem:[#allocation5 + $0x320] sm:$0xff]
    %v149 = vld [vmem:[#allocation5 + $0x328] sm:$0xff]
    %v150 = vld [vmem:[#allocation5 + $0x330] sm:$0xff]
    %v151 = vld [vmem:[#allocation5 + $0x338] sm:$0xff]
    %v152 = vld [vmem:[#allocation5 + $0x340] sm:$0xff]
    %v153 = vld [vmem:[#allocation5 + $0x348] sm:$0xff]
    %v154 = vld [vmem:[#allocation5 + $0x350] sm:$0xff]
    %v155 = vld [vmem:[#allocation5 + $0x358] sm:$0xff]
    %v156 = vld [vmem:[#allocation5 + $0x360] sm:$0xff]
    %v157 = vld [vmem:[#allocation5 + $0x368] sm:$0xff]
    %v158 = vld [vmem:[#allocation5 + $0x370] sm:$0xff]
    %v159 = vld [vmem:[#allocation5 + $0x378] sm:$0xff]
    %v160 = vld [vmem:[#allocation5 + $0x380] sm:$0xff]
    %v161 = vld [vmem:[#allocation5 + $0x388] sm:$0xff]
    %v162 = vld [vmem:[#allocation5 + $0x390] sm:$0xff]
    %v163 = vld [vmem:[#allocation5 + $0x398] sm:$0xff]
    %v164 = vld [vmem:[#allocation5 + $0x3a0] sm:$0xff]
    %v165 = vld [vmem:[#allocation5 + $0x3a8] sm:$0xff]
    %v166 = vld [vmem:[#allocation5 + $0x3b0] sm:$0xff]
    %v167 = vld [vmem:[#allocation5 + $0x3b8] sm:$0xff]
    %v168 = vld [vmem:[#allocation5 + $0x3c0] sm:$0xff]
    %v169 = vld [vmem:[#allocation5 + $0x3c8] sm:$0xff]
    %v170 = vld [vmem:[#allocation5 + $0x3d0] sm:$0xff]
    %v171 = vld [vmem:[#allocation5 + $0x3d8] sm:$0xff]
    %v172 = vld [vmem:[#allocation5 + $0x3e0] sm:$0xff]
    %v173 = vld [vmem:[#allocation5 + $0x3e8] sm:$0xff]
    %v174 = vld [vmem:[#allocation5 + $0x3f0] sm:$0xff]
    %v175 = vld [vmem:[#allocation5 + $0x3f8] sm:$0xff]
    %v176 = vunpack.c.l.bf16 %v48
    %v177 = vunpack.c.h.bf16 %v48
    %v178 = vunpack.c.l.bf16 %v49
    %v179 = vunpack.c.h.bf16 %v49
    %v180 = vunpack.c.l.bf16 %v50
    %v181 = vunpack.c.h.bf16 %v50
    %v182 = vunpack.c.l.bf16 %v51
    %v183 = vunpack.c.h.bf16 %v51
    %v184 = vunpack.c.l.bf16 %v52
    %v185 = vunpack.c.h.bf16 %v52
    %v186 = vunpack.c.l.bf16 %v53
    %v187 = vunpack.c.h.bf16 %v53
    %v188 = vunpack.c.l.bf16 %v54
    %v189 = vunpack.c.h.bf16 %v54
    %v190 = vunpack.c.l.bf16 %v55
    %v191 = vunpack.c.h.bf16 %v55
    %v192 = vunpack.c.l.bf16 %v56
    %v193 = vunpack.c.h.bf16 %v56
    %v194 = vunpack.c.l.bf16 %v57
    %v195 = vunpack.c.h.bf16 %v57
    %v196 = vunpack.c.l.bf16 %v58
    %v197 = vunpack.c.h.bf16 %v58
    %v198 = vunpack.c.l.bf16 %v59
    %v199 = vunpack.c.h.bf16 %v59
    %v200 = vunpack.c.l.bf16 %v60
    %v201 = vunpack.c.h.bf16 %v60
    %v202 = vunpack.c.l.bf16 %v61
    %v203 = vunpack.c.h.bf16 %v61
    %v204 = vunpack.c.l.bf16 %v62
    %v205 = vunpack.c.h.bf16 %v62
    %v206 = vunpack.c.l.bf16 %v63
    %v207 = vunpack.c.h.bf16 %v63
    %v208 = vunpack.c.l.bf16 %v64
    %v209 = vunpack.c.h.bf16 %v64
    %v210 = vunpack.c.l.bf16 %v65
    %v211 = vunpack.c.h.bf16 %v65
    %v212 = vunpack.c.l.bf16 %v66
    %v213 = vunpack.c.h.bf16 %v66
    %v214 = vunpack.c.l.bf16 %v67
    %v215 = vunpack.c.h.bf16 %v67
    %v216 = vunpack.c.l.bf16 %v68
    %v217 = vunpack.c.h.bf16 %v68
    %v218 = vunpack.c.l.bf16 %v69
    %v219 = vunpack.c.h.bf16 %v69
    %v220 = vunpack.c.l.bf16 %v70
    %v221 = vunpack.c.h.bf16 %v70
    %v222 = vunpack.c.l.bf16 %v71
    %v223 = vunpack.c.h.bf16 %v71
    %v224 = vunpack.c.l.bf16 %v72
    %v225 = vunpack.c.h.bf16 %v72
    %v226 = vunpack.c.l.bf16 %v73
    %v227 = vunpack.c.h.bf16 %v73
    %v228 = vunpack.c.l.bf16 %v74
    %v229 = vunpack.c.h.bf16 %v74
    %v230 = vunpack.c.l.bf16 %v75
    %v231 = vunpack.c.h.bf16 %v75
    %v232 = vunpack.c.l.bf16 %v76
    %v233 = vunpack.c.h.bf16 %v76
    %v234 = vunpack.c.l.bf16 %v77
    %v235 = vunpack.c.h.bf16 %v77
    %v236 = vunpack.c.l.bf16 %v78
    %v237 = vunpack.c.h.bf16 %v78
    %v238 = vunpack.c.l.bf16 %v79
    %v239 = vunpack.c.h.bf16 %v79
    %v240 = vunpack.c.l.bf16 %v80
    %v241 = vunpack.c.h.bf16 %v80
    %v242 = vunpack.c.l.bf16 %v81
    %v243 = vunpack.c.h.bf16 %v81
    %v244 = vunpack.c.l.bf16 %v82
    %v245 = vunpack.c.h.bf16 %v82
    %v246 = vunpack.c.l.bf16 %v83
    %v247 = vunpack.c.h.bf16 %v83
    %v248 = vunpack.c.l.bf16 %v84
    %v249 = vunpack.c.h.bf16 %v84
    %v250 = vunpack.c.l.bf16 %v85
    %v251 = vunpack.c.h.bf16 %v85
    %v252 = vunpack.c.l.bf16 %v86
    %v253 = vunpack.c.h.bf16 %v86
    %v254 = vunpack.c.l.bf16 %v87
    %v255 = vunpack.c.h.bf16 %v87
    %v256 = vunpack.c.l.bf16 %v88
    %v257 = vunpack.c.h.bf16 %v88
    %v258 = vunpack.c.l.bf16 %v89
    %v259 = vunpack.c.h.bf16 %v89
    %v260 = vunpack.c.l.bf16 %v90
    %v261 = vunpack.c.h.bf16 %v90
    %v262 = vunpack.c.l.bf16 %v91
    %v263 = vunpack.c.h.bf16 %v91
    %v264 = vunpack.c.l.bf16 %v92
    %v265 = vunpack.c.h.bf16 %v92
    %v266 = vunpack.c.l.bf16 %v93
    %v267 = vunpack.c.h.bf16 %v93
    %v268 = vunpack.c.l.bf16 %v94
    %v269 = vunpack.c.h.bf16 %v94
    %v270 = vunpack.c.l.bf16 %v95
    %v271 = vunpack.c.h.bf16 %v95
    %v272 = vunpack.c.l.bf16 %v96
    %v273 = vunpack.c.h.bf16 %v96
    %v274 = vunpack.c.l.bf16 %v97
    %v275 = vunpack.c.h.bf16 %v97
    %v276 = vunpack.c.l.bf16 %v98
    %v277 = vunpack.c.h.bf16 %v98
    %v278 = vunpack.c.l.bf16 %v99
    %v279 = vunpack.c.h.bf16 %v99
    %v280 = vunpack.c.l.bf16 %v100
    %v281 = vunpack.c.h.bf16 %v100
    %v282 = vunpack.c.l.bf16 %v101
    %v283 = vunpack.c.h.bf16 %v101
    %v284 = vunpack.c.l.bf16 %v102
    %v285 = vunpack.c.h.bf16 %v102
    %v286 = vunpack.c.l.bf16 %v103
    %v287 = vunpack.c.h.bf16 %v103
    %v288 = vunpack.c.l.bf16 %v104
    %v289 = vunpack.c.h.bf16 %v104
    %v290 = vunpack.c.l.bf16 %v105
    %v291 = vunpack.c.h.bf16 %v105
    %v292 = vunpack.c.l.bf16 %v106
    %v293 = vunpack.c.h.bf16 %v106
    %v294 = vunpack.c.l.bf16 %v107
    %v295 = vunpack.c.h.bf16 %v107
    %v296 = vunpack.c.l.bf16 %v108
    %v297 = vunpack.c.h.bf16 %v108
    %v298 = vunpack.c.l.bf16 %v109
    %v299 = vunpack.c.h.bf16 %v109
    %v300 = vunpack.c.l.bf16 %v110
    %v301 = vunpack.c.h.bf16 %v110
    %v302 = vunpack.c.l.bf16 %v111
    %v303 = vunpack.c.h.bf16 %v111
    %v304 = vunpack.c.l.bf16 %v112
    %v305 = vunpack.c.h.bf16 %v112
    %v306 = vunpack.c.l.bf16 %v113
    %v307 = vunpack.c.h.bf16 %v113
    %v308 = vunpack.c.l.bf16 %v114
    %v309 = vunpack.c.h.bf16 %v114
    %v310 = vunpack.c.l.bf16 %v115
    %v311 = vunpack.c.h.bf16 %v115
    %v312 = vunpack.c.l.bf16 %v116
    %v313 = vunpack.c.h.bf16 %v116
    %v314 = vunpack.c.l.bf16 %v117
    %v315 = vunpack.c.h.bf16 %v117
    %v316 = vunpack.c.l.bf16 %v118
    %v317 = vunpack.c.h.bf16 %v118
    %v318 = vunpack.c.l.bf16 %v119
    %v319 = vunpack.c.h.bf16 %v119
    %v320 = vunpack.c.l.bf16 %v120
    %v321 = vunpack.c.h.bf16 %v120
    %v322 = vunpack.c.l.bf16 %v121
    %v323 = vunpack.c.h.bf16 %v121
    %v324 = vunpack.c.l.bf16 %v122
    %v325 = vunpack.c.h.bf16 %v122
    %v326 = vunpack.c.l.bf16 %v123
    %v327 = vunpack.c.h.bf16 %v123
    %v328 = vunpack.c.l.bf16 %v124
    %v329 = vunpack.c.h.bf16 %v124
    %v330 = vunpack.c.l.bf16 %v125
    %v331 = vunpack.c.h.bf16 %v125
    %v332 = vunpack.c.l.bf16 %v126
    %v333 = vunpack.c.h.bf16 %v126
    %v334 = vunpack.c.l.bf16 %v127
    %v335 = vunpack.c.h.bf16 %v127
    %v336 = vunpack.c.l.bf16 %v128
    %v337 = vunpack.c.h.bf16 %v128
    %v338 = vunpack.c.l.bf16 %v129
    %v339 = vunpack.c.h.bf16 %v129
    %v340 = vunpack.c.l.bf16 %v130
    %v341 = vunpack.c.h.bf16 %v130
    %v342 = vunpack.c.l.bf16 %v131
    %v343 = vunpack.c.h.bf16 %v131
    %v344 = vunpack.c.l.bf16 %v132
    %v345 = vunpack.c.h.bf16 %v132
    %v346 = vunpack.c.l.bf16 %v133
    %v347 = vunpack.c.h.bf16 %v133
    %v348 = vunpack.c.l.bf16 %v134
    %v349 = vunpack.c.h.bf16 %v134
    %v350 = vunpack.c.l.bf16 %v135
    %v351 = vunpack.c.h.bf16 %v135
    %v352 = vunpack.c.l.bf16 %v136
    %v353 = vunpack.c.h.bf16 %v136
    %v354 = vunpack.c.l.bf16 %v137
    %v355 = vunpack.c.h.bf16 %v137
    %v356 = vunpack.c.l.bf16 %v138
    %v357 = vunpack.c.h.bf16 %v138
    %v358 = vunpack.c.l.bf16 %v139
    %v359 = vunpack.c.h.bf16 %v139
    %v360 = vunpack.c.l.bf16 %v140
    %v361 = vunpack.c.h.bf16 %v140
    %v362 = vunpack.c.l.bf16 %v141
    %v363 = vunpack.c.h.bf16 %v141
    %v364 = vunpack.c.l.bf16 %v142
    %v365 = vunpack.c.h.bf16 %v142
    %v366 = vunpack.c.l.bf16 %v143
    %v367 = vunpack.c.h.bf16 %v143
    %v368 = vunpack.c.l.bf16 %v144
    %v369 = vunpack.c.h.bf16 %v144
    %v370 = vunpack.c.l.bf16 %v145
    %v371 = vunpack.c.h.bf16 %v145
    %v372 = vunpack.c.l.bf16 %v146
    %v373 = vunpack.c.h.bf16 %v146
    %v374 = vunpack.c.l.bf16 %v147
    %v375 = vunpack.c.h.bf16 %v147
    %v376 = vunpack.c.l.bf16 %v148
    %v377 = vunpack.c.h.bf16 %v148
    %v378 = vunpack.c.l.bf16 %v149
    %v379 = vunpack.c.h.bf16 %v149
    %v380 = vunpack.c.l.bf16 %v150
    %v381 = vunpack.c.h.bf16 %v150
    %v382 = vunpack.c.l.bf16 %v151
    %v383 = vunpack.c.h.bf16 %v151
    %v384 = vunpack.c.l.bf16 %v152
    %v385 = vunpack.c.h.bf16 %v152
    %v386 = vunpack.c.l.bf16 %v153
    %v387 = vunpack.c.h.bf16 %v153
    %v388 = vunpack.c.l.bf16 %v154
    %v389 = vunpack.c.h.bf16 %v154
    %v390 = vunpack.c.l.bf16 %v155
    %v391 = vunpack.c.h.bf16 %v155
    %v392 = vunpack.c.l.bf16 %v156
    %v393 = vunpack.c.h.bf16 %v156
    %v394 = vunpack.c.l.bf16 %v157
    %v395 = vunpack.c.h.bf16 %v157
    %v396 = vunpack.c.l.bf16 %v158
    %v397 = vunpack.c.h.bf16 %v158
    %v398 = vunpack.c.l.bf16 %v159
    %v399 = vunpack.c.h.bf16 %v159
    %v400 = vunpack.c.l.bf16 %v160
    %v401 = vunpack.c.h.bf16 %v160
    %v402 = vunpack.c.l.bf16 %v161
    %v403 = vunpack.c.h.bf16 %v161
    %v404 = vunpack.c.l.bf16 %v162
    %v405 = vunpack.c.h.bf16 %v162
    %v406 = vunpack.c.l.bf16 %v163
    %v407 = vunpack.c.h.bf16 %v163
    %v408 = vunpack.c.l.bf16 %v164
    %v409 = vunpack.c.h.bf16 %v164
    %v410 = vunpack.c.l.bf16 %v165
    %v411 = vunpack.c.h.bf16 %v165
    %v412 = vunpack.c.l.bf16 %v166
    %v413 = vunpack.c.h.bf16 %v166
    %v414 = vunpack.c.l.bf16 %v167
    %v415 = vunpack.c.h.bf16 %v167
    %v416 = vunpack.c.l.bf16 %v168
    %v417 = vunpack.c.h.bf16 %v168
    %v418 = vunpack.c.l.bf16 %v169
    %v419 = vunpack.c.h.bf16 %v169
    %v420 = vunpack.c.l.bf16 %v170
    %v421 = vunpack.c.h.bf16 %v170
    %v422 = vunpack.c.l.bf16 %v171
    %v423 = vunpack.c.h.bf16 %v171
    %v424 = vunpack.c.l.bf16 %v172
    %v425 = vunpack.c.h.bf16 %v172
    %v426 = vunpack.c.l.bf16 %v173
    %v427 = vunpack.c.h.bf16 %v173
    %v428 = vunpack.c.l.bf16 %v174
    %v429 = vunpack.c.h.bf16 %v174
    %v430 = vunpack.c.l.bf16 %v175
    %v431 = vunpack.c.h.bf16 %v175
    %v432 = vld [vmem:[#allocation2] sm:$0xff]
    %434 = vset.pattern.permute.xlu0 0
    %435 = vperm.xlu0 %434, %v47
    %v436 = vpop.permute.xlu0 %435
    %v439 = vcombine.high %v432, %v432
    %vm440 = vcmask 31744
    %v442 = vsel %vm440, %v46, 0
    %vm444 = vcmask 1043456
    %v445 = vsel %vm444, %v432, 0
    %v447 = vsel %vm444, %v439, 0
    %449 = vmatprep.subr.mxu0 %v447
    %450 = vmatpush1.msra.mxu0 %v445
    %451 = vmatprep.subr.mxu0 0.0
    %452 = vmatpush1.msra.mxu0 0.0
    %453 = vmatprep.subr.mxu0 0.0
    %454 = vmatpush1.msra.mxu0 0.0
    %455 = vmatprep.subr.mxu0 0.0
    %456 = vmatpush1.msra.mxu0 0.0
    %457 = vmatprep.subr.mxu0 0.0
    %458 = vmatpush1.msra.mxu0 0.0
    %459 = vmatprep.subr.mxu0 0.0
    %460 = vmatpush1.msra.mxu0 0.0
    %461 = vmatprep.subr.mxu0 0.0
    %462 = vmatpush1.msra.mxu0 0.0
    %463 = vmatprep.subr.mxu0 0.0
    %464 = vmatpush1.msra.mxu0 0.0
    %465 = vmatprep.subr.mxu0 0.0
    %466 = vmatpush1.msra.mxu0 0.0
    %467 = vmatprep.subr.mxu0 0.0
    %468 = vmatpush1.msra.mxu0 0.0
    %469 = vmatprep.subr.mxu0 0.0
    %470 = vmatpush1.msra.mxu0 0.0
    %471 = vmatprep.subr.mxu0 0.0
    %472 = vmatpush1.msra.mxu0 0.0
    %473 = vmatprep.subr.mxu0 0.0
    %474 = vmatpush1.msra.mxu0 0.0
    %475 = vmatprep.subr.mxu0 0.0
    %476 = vmatpush1.msra.mxu0 0.0
    %477 = vmatprep.subr.mxu0 0.0
    %478 = vmatpush1.msra.mxu0 0.0
    %479 = vmatprep.subr.mxu0 0.0
    %480 = vmatpush1.msra.mxu0 0.0
    %481 = vmatprep.subr.mxu0 0.0
    %482 = vmatpush1.msra.mxu0 0.0
    %483 = vmatprep.subr.mxu0 0.0
    %484 = vmatpush1.msra.mxu0 0.0
    %485 = vmatprep.subr.mxu0 0.0
    %486 = vmatpush1.msra.mxu0 0.0
    %487 = vmatprep.subr.mxu0 0.0
    %488 = vmatpush1.msra.mxu0 0.0
    %489 = vmatprep.subr.mxu0 0.0
    %490 = vmatpush1.msra.mxu0 0.0
    %491 = vmatprep.subr.mxu0 0.0
    %492 = vmatpush1.msra.mxu0 0.0
    %493 = vmatprep.subr.mxu0 0.0
    %494 = vmatpush1.msra.mxu0 0.0
    %495 = vmatprep.subr.mxu0 0.0
    %496 = vmatpush1.msra.mxu0 0.0
    %497 = vmatprep.subr.mxu0 0.0
    %498 = vmatpush1.msra.mxu0 0.0
    %499 = vmatprep.subr.mxu0 0.0
    %500 = vmatpush1.msra.mxu0 0.0
    %501 = vmatprep.subr.mxu0 0.0
    %502 = vmatpush1.msra.mxu0 0.0
    %503 = vmatprep.subr.mxu0 0.0
    %504 = vmatpush1.msra.mxu0 0.0
    %505 = vmatprep.subr.mxu0 0.0
    %506 = vmatpush1.msra.mxu0 0.0
    %507 = vmatprep.subr.mxu0 0.0
    %508 = vmatpush1.msra.mxu0 0.0
    %509 = vmatprep.subr.mxu0 0.0
    %510 = vmatpush1.msra.mxu0 0.0
    %511 = vmatprep.subr.mxu0 0.0
    %512 = vmatpush1.msra.mxu0 0.0
    %513 = vmatprep.mubr.f32.mxu0 0.0
    %514 = vmatmul.mubr.f32.gmra.mrb[0].mxu0 %v442
    %v515 = vpop.f32.mrb[0].mxu0
    %v516 = vadd.f32 %v436, %v515
    %v517 = vpop.f32.mrb[0].mxu0
    %v518 = vadd.f32 %v436, %v517
    %519 = vdwg.mxu0
    %520 = vmatprep.subr.mxu0 %v177
    %521 = vmatpush1.msra.mxu0 %v176
    %522 = vmatprep.subr.mxu0 %v185
    %523 = vmatpush1.msra.mxu0 %v184
    %524 = vmatprep.subr.mxu0 %v193
    %525 = vmatpush1.msra.mxu0 %v192
    %526 = vmatprep.subr.mxu0 %v201
    %527 = vmatpush1.msra.mxu0 %v200
    %528 = vmatprep.subr.mxu0 %v209
    %529 = vmatpush1.msra.mxu0 %v208
    %530 = vmatprep.subr.mxu0 %v217
    %531 = vmatpush1.msra.mxu0 %v216
    %532 = vmatprep.subr.mxu0 %v225
    %533 = vmatpush1.msra.mxu0 %v224
    %534 = vmatprep.subr.mxu0 %v233
    %535 = vmatpush1.msra.mxu0 %v232
    %536 = vmatprep.subr.mxu0 %v241
    %537 = vmatpush1.msra.mxu0 %v240
    %538 = vmatprep.subr.mxu0 %v249
    %539 = vmatpush1.msra.mxu0 %v248
    %540 = vmatprep.subr.mxu0 %v257
    %541 = vmatpush1.msra.mxu0 %v256
    %542 = vmatprep.subr.mxu0 %v265
    %543 = vmatpush1.msra.mxu0 %v264
    %544 = vmatprep.subr.mxu0 %v273
    %545 = vmatpush1.msra.mxu0 %v272
    %546 = vmatprep.subr.mxu0 %v281
    %547 = vmatpush1.msra.mxu0 %v280
    %548 = vmatprep.subr.mxu0 %v289
    %549 = vmatpush1.msra.mxu0 %v288
    %550 = vmatprep.subr.mxu0 %v297
    %551 = vmatpush1.msra.mxu0 %v296
    %552 = vmatprep.subr.mxu0 %v305
    %553 = vmatpush1.msra.mxu0 %v304
    %554 = vmatprep.subr.mxu0 %v313
    %555 = vmatpush1.msra.mxu0 %v312
    %556 = vmatprep.subr.mxu0 %v321
    %557 = vmatpush1.msra.mxu0 %v320
    %558 = vmatprep.subr.mxu0 %v329
    %559 = vmatpush1.msra.mxu0 %v328
    %560 = vmatprep.subr.mxu0 %v337
    %561 = vmatpush1.msra.mxu0 %v336
    %562 = vmatprep.subr.mxu0 %v345
    %563 = vmatpush1.msra.mxu0 %v344
    %564 = vmatprep.subr.mxu0 %v353
    %565 = vmatpush1.msra.mxu0 %v352
    %566 = vmatprep.subr.mxu0 %v361
    %567 = vmatpush1.msra.mxu0 %v360
    %568 = vmatprep.subr.mxu0 %v369
    %569 = vmatpush1.msra.mxu0 %v368
    %570 = vmatprep.subr.mxu0 %v377
    %571 = vmatpush1.msra.mxu0 %v376
    %572 = vmatprep.subr.mxu0 %v385
    %573 = vmatpush1.msra.mxu0 %v384
    %574 = vmatprep.subr.mxu0 %v393
    %575 = vmatpush1.msra.mxu0 %v392
    %576 = vmatprep.subr.mxu0 %v401
    %577 = vmatpush1.msra.mxu0 %v400
    %578 = vmatprep.subr.mxu0 %v409
    %579 = vmatpush1.msra.mxu0 %v408
    %580 = vmatprep.subr.mxu0 %v417
    %581 = vmatpush1.msra.mxu0 %v416
    %582 = vmatprep.subr.mxu0 %v425
    %583 = vmatpush1.msra.mxu0 %v424
    %584 = vmatprep.mubr.f32.mxu0 %v518
    %585 = vmatmul.mubr.f32.gmra.mrb[0].mxu0 %v516
    %v586 = vpop.f32.mrb[0].mxu0
    %v587 = vadd.f32 0.0, %v586
    %v588 = vpop.f32.mrb[0].mxu0
    %v589 = vadd.f32 0.0, %v588
    %590 = vdwg.mxu0
    %591 = vmatprep.subr.mxu0 %v179
    %592 = vmatpush1.msra.mxu0 %v178
    %593 = vmatprep.subr.mxu0 %v187
    %594 = vmatpush1.msra.mxu0 %v186
    %595 = vmatprep.subr.mxu0 %v195
    %596 = vmatpush1.msra.mxu0 %v194
    %597 = vmatprep.subr.mxu0 %v203
    %598 = vmatpush1.msra.mxu0 %v202
    %599 = vmatprep.subr.mxu0 %v211
    %600 = vmatpush1.msra.mxu0 %v210
    %601 = vmatprep.subr.mxu0 %v219
    %602 = vmatpush1.msra.mxu0 %v218
    %603 = vmatprep.subr.mxu0 %v227
    %604 = vmatpush1.msra.mxu0 %v226
    %605 = vmatprep.subr.mxu0 %v235
    %606 = vmatpush1.msra.mxu0 %v234
    %607 = vmatprep.subr.mxu0 %v243
    %608 = vmatpush1.msra.mxu0 %v242
    %609 = vmatprep.subr.mxu0 %v251
    %610 = vmatpush1.msra.mxu0 %v250
    %611 = vmatprep.subr.mxu0 %v259
    %612 = vmatpush1.msra.mxu0 %v258
    %613 = vmatprep.subr.mxu0 %v267
    %614 = vmatpush1.msra.mxu0 %v266
    %615 = vmatprep.subr.mxu0 %v275
    %616 = vmatpush1.msra.mxu0 %v274
    %617 = vmatprep.subr.mxu0 %v283
    %618 = vmatpush1.msra.mxu0 %v282
    %619 = vmatprep.subr.mxu0 %v291
    %620 = vmatpush1.msra.mxu0 %v290
    %621 = vmatprep.subr.mxu0 %v299
    %622 = vmatpush1.msra.mxu0 %v298
    %623 = vmatprep.subr.mxu0 %v307
    %624 = vmatpush1.msra.mxu0 %v306
    %625 = vmatprep.subr.mxu0 %v315
    %626 = vmatpush1.msra.mxu0 %v314
    %627 = vmatprep.subr.mxu0 %v323
    %628 = vmatpush1.msra.mxu0 %v322
    %629 = vmatprep.subr.mxu0 %v331
    %630 = vmatpush1.msra.mxu0 %v330
    %631 = vmatprep.subr.mxu0 %v339
    %632 = vmatpush1.msra.mxu0 %v338
    %633 = vmatprep.subr.mxu0 %v347
    %634 = vmatpush1.msra.mxu0 %v346
    %635 = vmatprep.subr.mxu0 %v355
    %636 = vmatpush1.msra.mxu0 %v354
    %637 = vmatprep.subr.mxu0 %v363
    %638 = vmatpush1.msra.mxu0 %v362
    %639 = vmatprep.subr.mxu0 %v371
    %640 = vmatpush1.msra.mxu0 %v370
    %641 = vmatprep.subr.mxu0 %v379
    %642 = vmatpush1.msra.mxu0 %v378
    %643 = vmatprep.subr.mxu0 %v387
    %644 = vmatpush1.msra.mxu0 %v386
    %645 = vmatprep.subr.mxu0 %v395
    %646 = vmatpush1.msra.mxu0 %v394
    %647 = vmatprep.subr.mxu0 %v403
    %648 = vmatpush1.msra.mxu0 %v402
    %649 = vmatprep.subr.mxu0 %v411
    %650 = vmatpush1.msra.mxu0 %v410
    %651 = vmatprep.subr.mxu0 %v419
    %652 = vmatpush1.msra.mxu0 %v418
    %653 = vmatprep.subr.mxu0 %v427
    %654 = vmatpush1.msra.mxu0 %v426
    %655 = vmatprep.mubr.f32.mxu0 %v518
    %656 = vmatmul.mubr.f32.gmra.mrb[0].mxu0 %v516
    %v657 = vpop.f32.mrb[0].mxu0
    %v658 = vadd.f32 0.0, %v657
    %v659 = vpop.f32.mrb[0].mxu0
    %v660 = vadd.f32 0.0, %v659
    %661 = vdwg.mxu0
    %662 = vmatprep.subr.mxu0 %v181
    %663 = vmatpush1.msra.mxu0 %v180
    %664 = vmatprep.subr.mxu0 %v189
    %665 = vmatpush1.msra.mxu0 %v188
    %666 = vmatprep.subr.mxu0 %v197
    %667 = vmatpush1.msra.mxu0 %v196
    %668 = vmatprep.subr.mxu0 %v205
    %669 = vmatpush1.msra.mxu0 %v204
    %670 = vmatprep.subr.mxu0 %v213
    %671 = vmatpush1.msra.mxu0 %v212
    %672 = vmatprep.subr.mxu0 %v221
    %673 = vmatpush1.msra.mxu0 %v220
    %674 = vmatprep.subr.mxu0 %v229
    %675 = vmatpush1.msra.mxu0 %v228
    %676 = vmatprep.subr.mxu0 %v237
    %677 = vmatpush1.msra.mxu0 %v236
    %678 = vmatprep.subr.mxu0 %v245
    %679 = vmatpush1.msra.mxu0 %v244
    %680 = vmatprep.subr.mxu0 %v253
    %681 = vmatpush1.msra.mxu0 %v252
    %682 = vmatprep.subr.mxu0 %v261
    %683 = vmatpush1.msra.mxu0 %v260
    %684 = vmatprep.subr.mxu0 %v269
    %685 = vmatpush1.msra.mxu0 %v268
    %686 = vmatprep.subr.mxu0 %v277
    %687 = vmatpush1.msra.mxu0 %v276
    %688 = vmatprep.subr.mxu0 %v285
    %689 = vmatpush1.msra.mxu0 %v284
    %690 = vmatprep.subr.mxu0 %v293
    %691 = vmatpush1.msra.mxu0 %v292
    %692 = vmatprep.subr.mxu0 %v301
    %693 = vmatpush1.msra.mxu0 %v300
    %694 = vmatprep.subr.mxu0 %v309
    %695 = vmatpush1.msra.mxu0 %v308
    %696 = vmatprep.subr.mxu0 %v317
    %697 = vmatpush1.msra.mxu0 %v316
    %698 = vmatprep.subr.mxu0 %v325
    %699 = vmatpush1.msra.mxu0 %v324
    %700 = vmatprep.subr.mxu0 %v333
    %701 = vmatpush1.msra.mxu0 %v332
    %702 = vmatprep.subr.mxu0 %v341
    %703 = vmatpush1.msra.mxu0 %v340
    %704 = vmatprep.subr.mxu0 %v349
    %705 = vmatpush1.msra.mxu0 %v348
    %706 = vmatprep.subr.mxu0 %v357
    %707 = vmatpush1.msra.mxu0 %v356
    %708 = vmatprep.subr.mxu0 %v365
    %709 = vmatpush1.msra.mxu0 %v364
    %710 = vmatprep.subr.mxu0 %v373
    %711 = vmatpush1.msra.mxu0 %v372
    %712 = vmatprep.subr.mxu0 %v381
    %713 = vmatpush1.msra.mxu0 %v380
    %714 = vmatprep.subr.mxu0 %v389
    %715 = vmatpush1.msra.mxu0 %v388
    %716 = vmatprep.subr.mxu0 %v397
    %717 = vmatpush1.msra.mxu0 %v396
    %718 = vmatprep.subr.mxu0 %v405
    %719 = vmatpush1.msra.mxu0 %v404
    %720 = vmatprep.subr.mxu0 %v413
    %721 = vmatpush1.msra.mxu0 %v412
    %722 = vmatprep.subr.mxu0 %v421
    %723 = vmatpush1.msra.mxu0 %v420
    %724 = vmatprep.subr.mxu0 %v429
    %725 = vmatpush1.msra.mxu0 %v428
    %726 = vmatprep.mubr.f32.mxu0 %v518
    %727 = vmatmul.mubr.f32.gmra.mrb[0].mxu0 %v516
    %v728 = vpop.f32.mrb[0].mxu0
    %v729 = vadd.f32 0.0, %v728
    %v730 = vpop.f32.mrb[0].mxu0
    %v731 = vadd.f32 0.0, %v730
    %732 = vdwg.mxu0
    %733 = vmatprep.subr.mxu0 %v183
    %734 = vmatpush1.msra.mxu0 %v182
    %735 = vmatprep.subr.mxu0 %v191
    %736 = vmatpush1.msra.mxu0 %v190
    %737 = vmatprep.subr.mxu0 %v199
    %738 = vmatpush1.msra.mxu0 %v198
    %739 = vmatprep.subr.mxu0 %v207
    %740 = vmatpush1.msra.mxu0 %v206
    %741 = vmatprep.subr.mxu0 %v215
    %742 = vmatpush1.msra.mxu0 %v214
    %743 = vmatprep.subr.mxu0 %v223
    %744 = vmatpush1.msra.mxu0 %v222
    %745 = vmatprep.subr.mxu0 %v231
    %746 = vmatpush1.msra.mxu0 %v230
    %747 = vmatprep.subr.mxu0 %v239
    %748 = vmatpush1.msra.mxu0 %v238
    %749 = vmatprep.subr.mxu0 %v247
    %750 = vmatpush1.msra.mxu0 %v246
    %751 = vmatprep.subr.mxu0 %v255
    %752 = vmatpush1.msra.mxu0 %v254
    %753 = vmatprep.subr.mxu0 %v263
    %754 = vmatpush1.msra.mxu0 %v262
    %755 = vmatprep.subr.mxu0 %v271
    %756 = vmatpush1.msra.mxu0 %v270
    %757 = vmatprep.subr.mxu0 %v279
    %758 = vmatpush1.msra.mxu0 %v278
    %759 = vmatprep.subr.mxu0 %v287
    %760 = vmatpush1.msra.mxu0 %v286
    %761 = vmatprep.subr.mxu0 %v295
    %762 = vmatpush1.msra.mxu0 %v294
    %763 = vmatprep.subr.mxu0 %v303
    %764 = vmatpush1.msra.mxu0 %v302
    %765 = vmatprep.subr.mxu0 %v311
    %766 = vmatpush1.msra.mxu0 %v310
    %767 = vmatprep.subr.mxu0 %v319
    %768 = vmatpush1.msra.mxu0 %v318
    %769 = vmatprep.subr.mxu0 %v327
    %770 = vmatpush1.msra.mxu0 %v326
    %771 = vmatprep.subr.mxu0 %v335
    %772 = vmatpush1.msra.mxu0 %v334
    %773 = vmatprep.subr.mxu0 %v343
    %774 = vmatpush1.msra.mxu0 %v342
    %775 = vmatprep.subr.mxu0 %v351
    %776 = vmatpush1.msra.mxu0 %v350
    %777 = vmatprep.subr.mxu0 %v359
    %778 = vmatpush1.msra.mxu0 %v358
    %779 = vmatprep.subr.mxu0 %v367
    %780 = vmatpush1.msra.mxu0 %v366
    %781 = vmatprep.subr.mxu0 %v375
    %782 = vmatpush1.msra.mxu0 %v374
    %783 = vmatprep.subr.mxu0 %v383
    %784 = vmatpush1.msra.mxu0 %v382
    %785 = vmatprep.subr.mxu0 %v391
    %786 = vmatpush1.msra.mxu0 %v390
    %787 = vmatprep.subr.mxu0 %v399
    %788 = vmatpush1.msra.mxu0 %v398
    %789 = vmatprep.subr.mxu0 %v407
    %790 = vmatpush1.msra.mxu0 %v406
    %791 = vmatprep.subr.mxu0 %v415
    %792 = vmatpush1.msra.mxu0 %v414
    %793 = vmatprep.subr.mxu0 %v423
    %794 = vmatpush1.msra.mxu0 %v422
    %795 = vmatprep.subr.mxu0 %v431
    %796 = vmatpush1.msra.mxu0 %v430
    %797 = vmatprep.mubr.f32.mxu0 %v518
    %798 = vmatmul.mubr.f32.gmra.mrb[0].mxu0 %v516
    %v799 = vpop.f32.mrb[0].mxu0
    %v800 = vadd.f32 0.0, %v799
    %v801 = vpop.f32.mrb[0].mxu0
    %v802 = vadd.f32 0.0, %v801
    %803 = vdwg.mxu0
    %v804 = vxor.u32 %v587, 2147483648
    %v805 = vxor.u32 %v589, 2147483648
    %v806 = vxor.u32 %v658, 2147483648
    %v807 = vxor.u32 %v660, 2147483648
    %v808 = vxor.u32 %v729, 2147483648
    %v809 = vxor.u32 %v731, 2147483648
    %v810 = vxor.u32 %v800, 2147483648
    %v811 = vxor.u32 %v802, 2147483648
    %v812 = vmul.f32 %v804, 1.442695
    %v813 = vpow.pop %v812
    %v814 = vmul.f32 %v805, 1.442695
    %v815 = vpow.pop %v814
    %v816 = vmul.f32 %v806, 1.442695
    %v817 = vpow.pop %v816
    %v818 = vmul.f32 %v807, 1.442695
    %v819 = vpow.pop %v818
    %v820 = vmul.f32 %v808, 1.442695
    %v821 = vpow.pop %v820
    %v822 = vmul.f32 %v809, 1.442695
    %v823 = vpow.pop %v822
    %v824 = vmul.f32 %v810, 1.442695
    %v825 = vpow.pop %v824
    %v826 = vmul.f32 %v811, 1.442695
    %v827 = vpow.pop %v826
    %v828 = vadd.f32 %v813, 1.0
    %v829 = vadd.f32 %v815, 1.0
    %v830 = vadd.f32 %v817, 1.0
    %v831 = vadd.f32 %v819, 1.0
    %v832 = vadd.f32 %v821, 1.0
    %v833 = vadd.f32 %v823, 1.0
    %v834 = vadd.f32 %v825, 1.0
    %v835 = vadd.f32 %v827, 1.0
    %v836 = vrcp.pop %v828
    %v837 = vmul.f32 1.0, %v836
    %v838 = vrcp.pop %v829
    %v839 = vmul.f32 1.0, %v838
    %v840 = vrcp.pop %v830
    %v841 = vmul.f32 1.0, %v840
    %v842 = vrcp.pop %v831
    %v843 = vmul.f32 1.0, %v842
    %v844 = vrcp.pop %v832
    %v845 = vmul.f32 1.0, %v844
    %v846 = vrcp.pop %v833
    %v847 = vmul.f32 1.0, %v846
    %v848 = vrcp.pop %v834
    %v849 = vmul.f32 1.0, %v848
    %v850 = vrcp.pop %v835
    %v851 = vmul.f32 1.0, %v850
    %vm852 = vcmask 1042432
    %v853 = vsel %vm852, %v837, 0.0
    %v854 = vrot.slane %v853, 4
    %v855 = vadd.f32 %v853, %v854
    %v856 = vrot.slane %v855, 2
    %v857 = vadd.f32 %v855, %v856
    %v858 = vrot.slane %v857, 1
    %v859 = vadd.f32 %v857, %v858
    %v860 = vsel %vm852, %v839, 0.0
    %v861 = vrot.slane %v860, 4
    %v862 = vadd.f32 %v860, %v861
    %v863 = vrot.slane %v862, 2
    %v864 = vadd.f32 %v862, %v863
    %v865 = vrot.slane %v864, 1
    %v866 = vadd.f32 %v864, %v865
    %v867 = vsel %vm852, %v841, 0.0
    %v868 = vrot.slane %v867, 4
    %v869 = vadd.f32 %v867, %v868
    %v870 = vrot.slane %v869, 2
    %v871 = vadd.f32 %v869, %v870
    %v872 = vrot.slane %v871, 1
    %v873 = vadd.f32 %v871, %v872
    %v874 = vsel %vm852, %v843, 0.0
    %v875 = vrot.slane %v874, 4
    %v876 = vadd.f32 %v874, %v875
    %v877 = vrot.slane %v876, 2
    %v878 = vadd.f32 %v876, %v877
    %v879 = vrot.slane %v878, 1
    %v880 = vadd.f32 %v878, %v879
    %v881 = vsel %vm852, %v845, 0.0
    %v882 = vrot.slane %v881, 4
    %v883 = vadd.f32 %v881, %v882
    %v884 = vrot.slane %v883, 2
    %v885 = vadd.f32 %v883, %v884
    %v886 = vrot.slane %v885, 1
    %v887 = vadd.f32 %v885, %v886
    %v888 = vsel %vm852, %v847, 0.0
    %v889 = vrot.slane %v888, 4
    %v890 = vadd.f32 %v888, %v889
    %v891 = vrot.slane %v890, 2
    %v892 = vadd.f32 %v890, %v891
    %v893 = vrot.slane %v892, 1
    %v894 = vadd.f32 %v892, %v893
    %v895 = vsel %vm852, %v849, 0.0
    %v896 = vrot.slane %v895, 4
    %v897 = vadd.f32 %v895, %v896
    %v898 = vrot.slane %v897, 2
    %v899 = vadd.f32 %v897, %v898
    %v900 = vrot.slane %v899, 1
    %v901 = vadd.f32 %v899, %v900
    %v902 = vsel %vm852, %v851, 0.0
    %v903 = vrot.slane %v902, 4
    %v904 = vadd.f32 %v902, %v903
    %v905 = vrot.slane %v904, 2
    %v906 = vadd.f32 %v904, %v905
    %v907 = vrot.slane %v906, 1
    %v908 = vadd.f32 %v906, %v907
    %s909 = scalar_lea.vmem [#allocation2], 8
    %v910 = vld [vmem:[%s909] sm:$0xff]
    %v912 = vcombine.high %v910, %v910
    %v913 = vsel %vm444, %v910, 0
    %v915 = vsel %vm444, %v912, 0
    %917 = vmatprep.subr.mxu0 %v915
    %918 = vmatpush1.msra.mxu0 %v913
    %919 = vmatprep.subr.mxu0 0.0
    %920 = vmatpush1.msra.mxu0 0.0
    %921 = vmatprep.subr.mxu0 0.0
    %922 = vmatpush1.msra.mxu0 0.0
    %923 = vmatprep.subr.mxu0 0.0
    %924 = vmatpush1.msra.mxu0 0.0
    %925 = vmatprep.subr.mxu0 0.0
    %926 = vmatpush1.msra.mxu0 0.0
    %927 = vmatprep.subr.mxu0 0.0
    %928 = vmatpush1.msra.mxu0 0.0
    %929 = vmatprep.subr.mxu0 0.0
    %930 = vmatpush1.msra.mxu0 0.0
    %931 = vmatprep.subr.mxu0 0.0
    %932 = vmatpush1.msra.mxu0 0.0
    %933 = vmatprep.subr.mxu0 0.0
    %934 = vmatpush1.msra.mxu0 0.0
    %935 = vmatprep.subr.mxu0 0.0
    %936 = vmatpush1.msra.mxu0 0.0
    %937 = vmatprep.subr.mxu0 0.0
    %938 = vmatpush1.msra.mxu0 0.0
    %939 = vmatprep.subr.mxu0 0.0
    %940 = vmatpush1.msra.mxu0 0.0
    %941 = vmatprep.subr.mxu0 0.0
    %942 = vmatpush1.msra.mxu0 0.0
    %943 = vmatprep.subr.mxu0 0.0
    %944 = vmatpush1.msra.mxu0 0.0
    %945 = vmatprep.subr.mxu0 0.0
    %946 = vmatpush1.msra.mxu0 0.0
    %947 = vmatprep.subr.mxu0 0.0
    %948 = vmatpush1.msra.mxu0 0.0
    %949 = vmatprep.subr.mxu0 0.0
    %950 = vmatpush1.msra.mxu0 0.0
    %951 = vmatprep.subr.mxu0 0.0
    %952 = vmatpush1.msra.mxu0 0.0
    %953 = vmatprep.subr.mxu0 0.0
    %954 = vmatpush1.msra.mxu0 0.0
    %955 = vmatprep.subr.mxu0 0.0
    %956 = vmatpush1.msra.mxu0 0.0
    %957 = vmatprep.subr.mxu0 0.0
    %958 = vmatpush1.msra.mxu0 0.0
    %959 = vmatprep.subr.mxu0 0.0
    %960 = vmatpush1.msra.mxu0 0.0
    %961 = vmatprep.subr.mxu0 0.0
    %962 = vmatpush1.msra.mxu0 0.0
    %963 = vmatprep.subr.mxu0 0.0
    %964 = vmatpush1.msra.mxu0 0.0
    %965 = vmatprep.subr.mxu0 0.0
    %966 = vmatpush1.msra.mxu0 0.0
    %967 = vmatprep.subr.mxu0 0.0
    %968 = vmatpush1.msra.mxu0 0.0
    %969 = vmatprep.subr.mxu0 0.0
    %970 = vmatpush1.msra.mxu0 0.0
    %971 = vmatprep.subr.mxu0 0.0
    %972 = vmatpush1.msra.mxu0 0.0
    %973 = vmatprep.subr.mxu0 0.0
    %974 = vmatpush1.msra.mxu0 0.0
    %975 = vmatprep.subr.mxu0 0.0
    %976 = vmatpush1.msra.mxu0 0.0
    %977 = vmatprep.subr.mxu0 0.0
    %978 = vmatpush1.msra.mxu0 0.0
    %979 = vmatprep.subr.mxu0 0.0
    %980 = vmatpush1.msra.mxu0 0.0
    %981 = vmatprep.mubr.f32.mxu0 0.0
    %982 = vmatmul.mubr.f32.gmra.mrb[0].mxu0 %v442
    %v983 = vpop.f32.mrb[0].mxu0
    %v984 = vadd.f32 %v436, %v983
    %v985 = vpop.f32.mrb[0].mxu0
    %v986 = vadd.f32 %v436, %v985
    %987 = vdwg.mxu0
    %988 = vmatprep.subr.mxu0 %v177
    %989 = vmatpush1.msra.mxu0 %v176
    %990 = vmatprep.subr.mxu0 %v185
    %991 = vmatpush1.msra.mxu0 %v184
    %992 = vmatprep.subr.mxu0 %v193
    %993 = vmatpush1.msra.mxu0 %v192
    %994 = vmatprep.subr.mxu0 %v201
    %995 = vmatpush1.msra.mxu0 %v200
    %996 = vmatprep.subr.mxu0 %v209
    %997 = vmatpush1.msra.mxu0 %v208
    %998 = vmatprep.subr.mxu0 %v217
    %999 = vmatpush1.msra.mxu0 %v216
    %1000 = vmatprep.subr.mxu0 %v225
    %1001 = vmatpush1.msra.mxu0 %v224
    %1002 = vmatprep.subr.mxu0 %v233
    %1003 = vmatpush1.msra.mxu0 %v232
    %1004 = vmatprep.subr.mxu0 %v241
    %1005 = vmatpush1.msra.mxu0 %v240
    %1006 = vmatprep.subr.mxu0 %v249
    %1007 = vmatpush1.msra.mxu0 %v248
    %1008 = vmatprep.subr.mxu0 %v257
    %1009 = vmatpush1.msra.mxu0 %v256
    %1010 = vmatprep.subr.mxu0 %v265
    %1011 = vmatpush1.msra.mxu0 %v264
    %1012 = vmatprep.subr.mxu0 %v273
    %1013 = vmatpush1.msra.mxu0 %v272
    %1014 = vmatprep.subr.mxu0 %v281
    %1015 = vmatpush1.msra.mxu0 %v280
    %1016 = vmatprep.subr.mxu0 %v289
    %1017 = vmatpush1.msra.mxu0 %v288
    %1018 = vmatprep.subr.mxu0 %v297
    %1019 = vmatpush1.msra.mxu0 %v296
    %1020 = vmatprep.subr.mxu0 %v305
    %1021 = vmatpush1.msra.mxu0 %v304
    %1022 = vmatprep.subr.mxu0 %v313
    %1023 = vmatpush1.msra.mxu0 %v312
    %1024 = vmatprep.subr.mxu0 %v321
    %1025 = vmatpush1.msra.mxu0 %v320
    %1026 = vmatprep.subr.mxu0 %v329
    %1027 = vmatpush1.msra.mxu0 %v328
    %1028 = vmatprep.subr.mxu0 %v337
    %1029 = vmatpush1.msra.mxu0 %v336
    %1030 = vmatprep.subr.mxu0 %v345
    %1031 = vmatpush1.msra.mxu0 %v344
    %1032 = vmatprep.subr.mxu0 %v353
    %1033 = vmatpush1.msra.mxu0 %v352
    %1034 = vmatprep.subr.mxu0 %v361
    %1035 = vmatpush1.msra.mxu0 %v360
    %1036 = vmatprep.subr.mxu0 %v369
    %1037 = vmatpush1.msra.mxu0 %v368
    %1038 = vmatprep.subr.mxu0 %v377
    %1039 = vmatpush1.msra.mxu0 %v376
    %1040 = vmatprep.subr.mxu0 %v385
    %1041 = vmatpush1.msra.mxu0 %v384
    %1042 = vmatprep.subr.mxu0 %v393
    %1043 = vmatpush1.msra.mxu0 %v392
    %1044 = vmatprep.subr.mxu0 %v401
    %1045 = vmatpush1.msra.mxu0 %v400
    %1046 = vmatprep.subr.mxu0 %v409
    %1047 = vmatpush1.msra.mxu0 %v408
    %1048 = vmatprep.subr.mxu0 %v417
    %1049 = vmatpush1.msra.mxu0 %v416
    %1050 = vmatprep.subr.mxu0 %v425
    %1051 = vmatpush1.msra.mxu0 %v424
    %1052 = vmatprep.mubr.f32.mxu0 %v986
    %1053 = vmatmul.mubr.f32.gmra.mrb[0].mxu0 %v984
    %v1054 = vpop.f32.mrb[0].mxu0
    %v1055 = vadd.f32 0.0, %v1054
    %v1056 = vpop.f32.mrb[0].mxu0
    %v1057 = vadd.f32 0.0, %v1056
    %1058 = vdwg.mxu0
    %1059 = vmatprep.subr.mxu0 %v179
    %1060 = vmatpush1.msra.mxu0 %v178
    %1061 = vmatprep.subr.mxu0 %v187
    %1062 = vmatpush1.msra.mxu0 %v186
    %1063 = vmatprep.subr.mxu0 %v195
    %1064 = vmatpush1.msra.mxu0 %v194
    %1065 = vmatprep.subr.mxu0 %v203
    %1066 = vmatpush1.msra.mxu0 %v202
    %1067 = vmatprep.subr.mxu0 %v211
    %1068 = vmatpush1.msra.mxu0 %v210
    %1069 = vmatprep.subr.mxu0 %v219
    %1070 = vmatpush1.msra.mxu0 %v218
    %1071 = vmatprep.subr.mxu0 %v227
    %1072 = vmatpush1.msra.mxu0 %v226
    %1073 = vmatprep.subr.mxu0 %v235
    %1074 = vmatpush1.msra.mxu0 %v234
    %1075 = vmatprep.subr.mxu0 %v243
    %1076 = vmatpush1.msra.mxu0 %v242
    %1077 = vmatprep.subr.mxu0 %v251
    %1078 = vmatpush1.msra.mxu0 %v250
    %1079 = vmatprep.subr.mxu0 %v259
    %1080 = vmatpush1.msra.mxu0 %v258
    %1081 = vmatprep.subr.mxu0 %v267
    %1082 = vmatpush1.msra.mxu0 %v266
    %1083 = vmatprep.subr.mxu0 %v275
    %1084 = vmatpush1.msra.mxu0 %v274
    %1085 = vmatprep.subr.mxu0 %v283
    %1086 = vmatpush1.msra.mxu0 %v282
    %1087 = vmatprep.subr.mxu0 %v291
    %1088 = vmatpush1.msra.mxu0 %v290
    %1089 = vmatprep.subr.mxu0 %v299
    %1090 = vmatpush1.msra.mxu0 %v298
    %1091 = vmatprep.subr.mxu0 %v307
    %1092 = vmatpush1.msra.mxu0 %v306
    %1093 = vmatprep.subr.mxu0 %v315
    %1094 = vmatpush1.msra.mxu0 %v314
    %1095 = vmatprep.subr.mxu0 %v323
    %1096 = vmatpush1.msra.mxu0 %v322
    %1097 = vmatprep.subr.mxu0 %v331
    %1098 = vmatpush1.msra.mxu0 %v330
    %1099 = vmatprep.subr.mxu0 %v339
    %1100 = vmatpush1.msra.mxu0 %v338
    %1101 = vmatprep.subr.mxu0 %v347
    %1102 = vmatpush1.msra.mxu0 %v346
    %1103 = vmatprep.subr.mxu0 %v355
    %1104 = vmatpush1.msra.mxu0 %v354
    %1105 = vmatprep.subr.mxu0 %v363
    %1106 = vmatpush1.msra.mxu0 %v362
    %1107 = vmatprep.subr.mxu0 %v371
    %1108 = vmatpush1.msra.mxu0 %v370
    %1109 = vmatprep.subr.mxu0 %v379
    %1110 = vmatpush1.msra.mxu0 %v378
    %1111 = vmatprep.subr.mxu0 %v387
    %1112 = vmatpush1.msra.mxu0 %v386
    %1113 = vmatprep.subr.mxu0 %v395
    %1114 = vmatpush1.msra.mxu0 %v394
    %1115 = vmatprep.subr.mxu0 %v403
    %1116 = vmatpush1.msra.mxu0 %v402
    %1117 = vmatprep.subr.mxu0 %v411
    %1118 = vmatpush1.msra.mxu0 %v410
    %1119 = vmatprep.subr.mxu0 %v419
    %1120 = vmatpush1.msra.mxu0 %v418
    %1121 = vmatprep.subr.mxu0 %v427
    %1122 = vmatpush1.msra.mxu0 %v426
    %1123 = vmatprep.mubr.f32.mxu0 %v986
    %1124 = vmatmul.mubr.f32.gmra.mrb[0].mxu0 %v984
    %v1125 = vpop.f32.mrb[0].mxu0
    %v1126 = vadd.f32 0.0, %v1125
    %v1127 = vpop.f32.mrb[0].mxu0
    %v1128 = vadd.f32 0.0, %v1127
    %1129 = vdwg.mxu0
    %1130 = vmatprep.subr.mxu0 %v181
    %1131 = vmatpush1.msra.mxu0 %v180
    %1132 = vmatprep.subr.mxu0 %v189
    %1133 = vmatpush1.msra.mxu0 %v188
    %1134 = vmatprep.subr.mxu0 %v197
    %1135 = vmatpush1.msra.mxu0 %v196
    %1136 = vmatprep.subr.mxu0 %v205
    %1137 = vmatpush1.msra.mxu0 %v204
    %1138 = vmatprep.subr.mxu0 %v213
    %1139 = vmatpush1.msra.mxu0 %v212
    %1140 = vmatprep.subr.mxu0 %v221
    %1141 = vmatpush1.msra.mxu0 %v220
    %1142 = vmatprep.subr.mxu0 %v229
    %1143 = vmatpush1.msra.mxu0 %v228
    %1144 = vmatprep.subr.mxu0 %v237
    %1145 = vmatpush1.msra.mxu0 %v236
    %1146 = vmatprep.subr.mxu0 %v245
    %1147 = vmatpush1.msra.mxu0 %v244
    %1148 = vmatprep.subr.mxu0 %v253
    %1149 = vmatpush1.msra.mxu0 %v252
    %1150 = vmatprep.subr.mxu0 %v261
    %1151 = vmatpush1.msra.mxu0 %v260
    %1152 = vmatprep.subr.mxu0 %v269
    %1153 = vmatpush1.msra.mxu0 %v268
    %1154 = vmatprep.subr.mxu0 %v277
    %1155 = vmatpush1.msra.mxu0 %v276
    %1156 = vmatprep.subr.mxu0 %v285
    %1157 = vmatpush1.msra.mxu0 %v284
    %1158 = vmatprep.subr.mxu0 %v293
    %1159 = vmatpush1.msra.mxu0 %v292
    %1160 = vmatprep.subr.mxu0 %v301
    %1161 = vmatpush1.msra.mxu0 %v300
    %1162 = vmatprep.subr.mxu0 %v309
    %1163 = vmatpush1.msra.mxu0 %v308
    %1164 = vmatprep.subr.mxu0 %v317
    %1165 = vmatpush1.msra.mxu0 %v316
    %1166 = vmatprep.subr.mxu0 %v325
    %1167 = vmatpush1.msra.mxu0 %v324
    %1168 = vmatprep.subr.mxu0 %v333
    %1169 = vmatpush1.msra.mxu0 %v332
    %1170 = vmatprep.subr.mxu0 %v341
    %1171 = vmatpush1.msra.mxu0 %v340
    %1172 = vmatprep.subr.mxu0 %v349
    %1173 = vmatpush1.msra.mxu0 %v348
    %1174 = vmatprep.subr.mxu0 %v357
    %1175 = vmatpush1.msra.mxu0 %v356
    %1176 = vmatprep.subr.mxu0 %v365
    %1177 = vmatpush1.msra.mxu0 %v364
    %1178 = vmatprep.subr.mxu0 %v373
    %1179 = vmatpush1.msra.mxu0 %v372
    %1180 = vmatprep.subr.mxu0 %v381
    %1181 = vmatpush1.msra.mxu0 %v380
    %1182 = vmatprep.subr.mxu0 %v389
    %1183 = vmatpush1.msra.mxu0 %v388
    %1184 = vmatprep.subr.mxu0 %v397
    %1185 = vmatpush1.msra.mxu0 %v396
    %1186 = vmatprep.subr.mxu0 %v405
    %1187 = vmatpush1.msra.mxu0 %v404
    %1188 = vmatprep.subr.mxu0 %v413
    %1189 = vmatpush1.msra.mxu0 %v412
    %1190 = vmatprep.subr.mxu0 %v421
    %1191 = vmatpush1.msra.mxu0 %v420
    %1192 = vmatprep.subr.mxu0 %v429
    %1193 = vmatpush1.msra.mxu0 %v428
    %1194 = vmatprep.mubr.f32.mxu0 %v986
    %1195 = vmatmul.mubr.f32.gmra.mrb[0].mxu0 %v984
    %v1196 = vpop.f32.mrb[0].mxu0
    %v1197 = vadd.f32 0.0, %v1196
    %v1198 = vpop.f32.mrb[0].mxu0
    %v1199 = vadd.f32 0.0, %v1198
    %1200 = vdwg.mxu0
    %1201 = vmatprep.subr.mxu0 %v183
    %1202 = vmatpush1.msra.mxu0 %v182
    %1203 = vmatprep.subr.mxu0 %v191
    %1204 = vmatpush1.msra.mxu0 %v190
    %1205 = vmatprep.subr.mxu0 %v199
    %1206 = vmatpush1.msra.mxu0 %v198
    %1207 = vmatprep.subr.mxu0 %v207
    %1208 = vmatpush1.msra.mxu0 %v206
    %1209 = vmatprep.subr.mxu0 %v215
    %1210 = vmatpush1.msra.mxu0 %v214
    %1211 = vmatprep.subr.mxu0 %v223
    %1212 = vmatpush1.msra.mxu0 %v222
    %1213 = vmatprep.subr.mxu0 %v231
    %1214 = vmatpush1.msra.mxu0 %v230
    %1215 = vmatprep.subr.mxu0 %v239
    %1216 = vmatpush1.msra.mxu0 %v238
    %1217 = vmatprep.subr.mxu0 %v247
    %1218 = vmatpush1.msra.mxu0 %v246
    %1219 = vmatprep.subr.mxu0 %v255
    %1220 = vmatpush1.msra.mxu0 %v254
    %1221 = vmatprep.subr.mxu0 %v263
    %1222 = vmatpush1.msra.mxu0 %v262
    %1223 = vmatprep.subr.mxu0 %v271
    %1224 = vmatpush1.msra.mxu0 %v270
    %1225 = vmatprep.subr.mxu0 %v279
    %1226 = vmatpush1.msra.mxu0 %v278
    %1227 = vmatprep.subr.mxu0 %v287
    %1228 = vmatpush1.msra.mxu0 %v286
    %1229 = vmatprep.subr.mxu0 %v295
    %1230 = vmatpush1.msra.mxu0 %v294
    %1231 = vmatprep.subr.mxu0 %v303
    %1232 = vmatpush1.msra.mxu0 %v302
    %1233 = vmatprep.subr.mxu0 %v311
    %1234 = vmatpush1.msra.mxu0 %v310
    %1235 = vmatprep.subr.mxu0 %v319
    %1236 = vmatpush1.msra.mxu0 %v318
    %1237 = vmatprep.subr.mxu0 %v327
    %1238 = vmatpush1.msra.mxu0 %v326
    %1239 = vmatprep.subr.mxu0 %v335
    %1240 = vmatpush1.msra.mxu0 %v334
    %1241 = vmatprep.subr.mxu0 %v343
    %1242 = vmatpush1.msra.mxu0 %v342
    %1243 = vmatprep.subr.mxu0 %v351
    %1244 = vmatpush1.msra.mxu0 %v350
    %1245 = vmatprep.subr.mxu0 %v359
    %1246 = vmatpush1.msra.mxu0 %v358
    %1247 = vmatprep.subr.mxu0 %v367
    %1248 = vmatpush1.msra.mxu0 %v366
    %1249 = vmatprep.subr.mxu0 %v375
    %1250 = vmatpush1.msra.mxu0 %v374
    %1251 = vmatprep.subr.mxu0 %v383
    %1252 = vmatpush1.msra.mxu0 %v382
    %1253 = vmatprep.subr.mxu0 %v391
    %1254 = vmatpush1.msra.mxu0 %v390
    %1255 = vmatprep.subr.mxu0 %v399
    %1256 = vmatpush1.msra.mxu0 %v398
    %1257 = vmatprep.subr.mxu0 %v407
    %1258 = vmatpush1.msra.mxu0 %v406
    %1259 = vmatprep.subr.mxu0 %v415
    %1260 = vmatpush1.msra.mxu0 %v414
    %1261 = vmatprep.subr.mxu0 %v423
    %1262 = vmatpush1.msra.mxu0 %v422
    %1263 = vmatprep.subr.mxu0 %v431
    %1264 = vmatpush1.msra.mxu0 %v430
    %1265 = vmatprep.mubr.f32.mxu0 %v986
    %1266 = vmatmul.mubr.f32.gmra.mrb[0].mxu0 %v984
    %v1267 = vpop.f32.mrb[0].mxu0
    %v1268 = vadd.f32 0.0, %v1267
    %v1269 = vpop.f32.mrb[0].mxu0
    %v1270 = vadd.f32 0.0, %v1269
    %1271 = vdwg.mxu0
    %v1272 = vxor.u32 %v1055, 2147483648
    %v1273 = vxor.u32 %v1057, 2147483648
    %v1274 = vxor.u32 %v1126, 2147483648
    %v1275 = vxor.u32 %v1128, 2147483648
    %v1276 = vxor.u32 %v1197, 2147483648
    %v1277 = vxor.u32 %v1199, 2147483648
    %v1278 = vxor.u32 %v1268, 2147483648
    %v1279 = vxor.u32 %v1270, 2147483648
    %v1280 = vmul.f32 %v1272, 1.442695
    %v1281 = vpow.pop %v1280
    %v1282 = vmul.f32 %v1273, 1.442695
    %v1283 = vpow.pop %v1282
    %v1284 = vmul.f32 %v1274, 1.442695
    %v1285 = vpow.pop %v1284
    %v1286 = vmul.f32 %v1275, 1.442695
    %v1287 = vpow.pop %v1286
    %v1288 = vmul.f32 %v1276, 1.442695
    %v1289 = vpow.pop %v1288
    %v1290 = vmul.f32 %v1277, 1.442695
    %v1291 = vpow.pop %v1290
    %v1292 = vmul.f32 %v1278, 1.442695
    %v1293 = vpow.pop %v1292
    %v1294 = vmul.f32 %v1279, 1.442695
    %v1295 = vpow.pop %v1294
    %v1296 = vadd.f32 %v1281, 1.0
    %v1297 = vadd.f32 %v1283, 1.0
    %v1298 = vadd.f32 %v1285, 1.0
    %v1299 = vadd.f32 %v1287, 1.0
    %v1300 = vadd.f32 %v1289, 1.0
    %v1301 = vadd.f32 %v1291, 1.0
    %v1302 = vadd.f32 %v1293, 1.0
    %v1303 = vadd.f32 %v1295, 1.0
    %v1304 = vrcp.pop %v1296
    %v1305 = vmul.f32 1.0, %v1304
    %v1306 = vrcp.pop %v1297
    %v1307 = vmul.f32 1.0, %v1306
    %v1308 = vrcp.pop %v1298
    %v1309 = vmul.f32 1.0, %v1308
    %v1310 = vrcp.pop %v1299
    %v1311 = vmul.f32 1.0, %v1310
    %v1312 = vrcp.pop %v1300
    %v1313 = vmul.f32 1.0, %v1312
    %v1314 = vrcp.pop %v1301
    %v1315 = vmul.f32 1.0, %v1314
    %v1316 = vrcp.pop %v1302
    %v1317 = vmul.f32 1.0, %v1316
    %v1318 = vrcp.pop %v1303
    %v1319 = vmul.f32 1.0, %v1318
    %v1320 = vsel %vm852, %v1305, 0.0
    %v1321 = vrot.slane %v1320, 4
    %v1322 = vadd.f32 %v1320, %v1321
    %v1323 = vrot.slane %v1322, 2
    %v1324 = vadd.f32 %v1322, %v1323
    %v1325 = vrot.slane %v1324, 1
    %v1326 = vadd.f32 %v1324, %v1325
    %v1327 = vsel %vm852, %v1307, 0.0
    %v1328 = vrot.slane %v1327, 4
    %v1329 = vadd.f32 %v1327, %v1328
    %v1330 = vrot.slane %v1329, 2
    %v1331 = vadd.f32 %v1329, %v1330
    %v1332 = vrot.slane %v1331, 1
    %v1333 = vadd.f32 %v1331, %v1332
    %v1334 = vsel %vm852, %v1309, 0.0
    %v1335 = vrot.slane %v1334, 4
    %v1336 = vadd.f32 %v1334, %v1335
    %v1337 = vrot.slane %v1336, 2
    %v1338 = vadd.f32 %v1336, %v1337
    %v1339 = vrot.slane %v1338, 1
    %v1340 = vadd.f32 %v1338, %v1339
    %v1341 = vsel %vm852, %v1311, 0.0
    %v1342 = vrot.slane %v1341, 4
    %v1343 = vadd.f32 %v1341, %v1342
    %v1344 = vrot.slane %v1343, 2
    %v1345 = vadd.f32 %v1343, %v1344
    %v1346 = vrot.slane %v1345, 1
    %v1347 = vadd.f32 %v1345, %v1346
    %v1348 = vsel %vm852, %v1313, 0.0
    %v1349 = vrot.slane %v1348, 4
    %v1350 = vadd.f32 %v1348, %v1349
    %v1351 = vrot.slane %v1350, 2
    %v1352 = vadd.f32 %v1350, %v1351
    %v1353 = vrot.slane %v1352, 1
    %v1354 = vadd.f32 %v1352, %v1353
    %v1355 = vsel %vm852, %v1315, 0.0
    %v1356 = vrot.slane %v1355, 4
    %v1357 = vadd.f32 %v1355, %v1356
    %v1358 = vrot.slane %v1357, 2
    %v1359 = vadd.f32 %v1357, %v1358
    %v1360 = vrot.slane %v1359, 1
    %v1361 = vadd.f32 %v1359, %v1360
    %v1362 = vsel %vm852, %v1317, 0.0
    %v1363 = vrot.slane %v1362, 4
    %v1364 = vadd.f32 %v1362, %v1363
    %v1365 = vrot.slane %v1364, 2
    %v1366 = vadd.f32 %v1364, %v1365
    %v1367 = vrot.slane %v1366, 1
    %v1368 = vadd.f32 %v1366, %v1367
    %v1369 = vsel %vm852, %v1319, 0.0
    %v1370 = vrot.slane %v1369, 4
    %v1371 = vadd.f32 %v1369, %v1370
    %v1372 = vrot.slane %v1371, 2
    %v1373 = vadd.f32 %v1371, %v1372
    %v1374 = vrot.slane %v1373, 1
    %v1375 = vadd.f32 %v1373, %v1374
    %vm1376 = vcmask 1040384
    %v1377 = vsel %vm1376, %v859, %v1326
    %v1378 = vsel %vm1376, %v866, %v1333
    %v1379 = vsel %vm1376, %v873, %v1340
    %v1380 = vsel %vm1376, %v880, %v1347
    %v1381 = vsel %vm1376, %v887, %v1354
    %v1382 = vsel %vm1376, %v894, %v1361
    %v1383 = vsel %vm1376, %v901, %v1368
    %v1384 = vsel %vm1376, %v908, %v1375
    %vm1385 = vcmp.gt.f32.partialorder %v1377, 1.5
    %vm1386 = vcmp.gt.f32.partialorder %v1378, 1.5
    %vm1387 = vcmp.gt.f32.partialorder %v1379, 1.5
    %vm1388 = vcmp.gt.f32.partialorder %v1380, 1.5
    %vm1389 = vcmp.gt.f32.partialorder %v1381, 1.5
    %vm1390 = vcmp.gt.f32.partialorder %v1382, 1.5
    %vm1391 = vcmp.gt.f32.partialorder %v1383, 1.5
    %vm1392 = vcmp.gt.f32.partialorder %v1384, 1.5
    %v1393 = vsel %vm1385, 1, 0
    %v1394 = vsel %vm1386, 1, 0
    %v1395 = vsel %vm1387, 1, 0
    %v1396 = vsel %vm1388, 1, 0
    %v1397 = vsel %vm1389, 1, 0
    %v1398 = vsel %vm1390, 1, 0
    %v1399 = vsel %vm1391, 1, 0
    %v1400 = vsel %vm1392, 1, 0
    %v1401 = vcvt.s32.f32 %v1393
    %v1402 = vcvt.s32.f32 %v1394
    %v1403 = vcvt.s32.f32 %v1395
    %v1404 = vcvt.s32.f32 %v1396
    %v1405 = vcvt.s32.f32 %v1397
    %v1406 = vcvt.s32.f32 %v1398
    %v1407 = vcvt.s32.f32 %v1399
    %v1408 = vcvt.s32.f32 %v1400
    %v1417 = vcombine.low %v1401, %v1402
    %v1418 = vcombine.low %v1403, %v1404
    %v1420 = vunpack.c.l.s4 1983009808
    %v1421 = vunpack.c.0.s8 %v1420
    %v1422 = vlaneseq
    %v1423 = vshrl.u32 %v1422, 7
    %v1424 = vsub.s32 %v1421, %v1423
    %v1425 = vrot.slane %v1417, %v1424
    %v1427 = vunpack.c.l.s4 1983009808
    %v1428 = vunpack.c.0.s8 %v1427
    %v1429 = vlaneseq
    %v1430 = vshrl.u32 %v1429, 7
    %v1431 = vsub.s32 %v1428, %v1430
    %v1432 = vrot.slane %v1418, %v1431
    %v1433 = vcombine.low %v1425, %v1432
    %v1434 = vcombine.low %v1405, %v1406
    %v1435 = vcombine.low %v1407, %v1408
    %v1437 = vunpack.c.l.s4 1983009808
    %v1438 = vunpack.c.0.s8 %v1437
    %v1439 = vlaneseq
    %v1440 = vshrl.u32 %v1439, 7
    %v1441 = vsub.s32 %v1438, %v1440
    %v1442 = vrot.slane %v1434, %v1441
    %v1444 = vunpack.c.l.s4 1983009808
    %v1445 = vunpack.c.0.s8 %v1444
    %v1446 = vlaneseq
    %v1447 = vshrl.u32 %v1446, 7
    %v1448 = vsub.s32 %v1445, %v1447
    %v1449 = vrot.slane %v1435, %v1448
    %v1450 = vcombine.low %v1442, %v1449
    %1453 = vst [vmem:[#allocation7] sm:$0xff] %v1433
    %1454 = vst [vmem:[#allocation7 + $0x8] sm:$0xff] %v1450
    // Predicated region
    $region26: #{tpu_custom_call.1} parent=1 // pred_check
      _
    $region27: #{tpu_custom_call.1} parent=1 // pred_check_branch
      %1456 = sbr.rel (0) target = $region29
    $region28: #{tpu_custom_call.1} parent=1 // pred_region
      %s1458 = ssub.s32 256, 256
      %1459 = vsyncadd [#allocation4], %s1458
      %s1461 = sshll.u32 [#allocation7], 4
      %s1462 = int_to_ptr.vmem [resolvable:$true] %s1461
      %1464 = dma.vmem_to_hbm [thread:$0]  %s1462, 256, %s4, [#allocation4]
    $region29: #{tpu_custom_call.1} parent=1 // pred_fallthru
      _
    // Predicated region
    $region30: #{tpu_custom_call.1} parent=1 // pred_check
      _
    $region31: #{tpu_custom_call.1} parent=1 // pred_check_branch
      %1466 = sbr.rel (0) target = $region33
    $region32: #{tpu_custom_call.1} parent=1 // pred_region
      %1467 = dma.done [#allocation4], 256
    $region33: #{tpu_custom_call.1} parent=1 // pred_fallthru
      _
    %1468 = vsyncpa [#allocation3], 1
    %1469 = vsyncpa [#allocation6], 1
    %1470 = vsyncpa [#allocation4], 1

</llo_original>
